<compile_context>
chip_gen: v7x
topology: tpu7x:2x2x1
jax: 0.10.0
libtpu: 0.0.40
codegen_flags: <defaults>
</compile_context>

<pallas_src>
import functools
import math

import jax
import jax.numpy as jnp
from jax import lax
from jax.experimental import pallas as pl
from jax.experimental.pallas import tpu as pltpu


# ---------------------------------------------------------------------------
# tiling / VMEM helpers
# ---------------------------------------------------------------------------

def _row_tile(n, target):
    """Sublane-aligned row tile + padded extent it divides.

    target must be a multiple of 8.  Small n -> one tile rounded up to a
    multiple of 8; large awkward n -> pad up to a multiple of `target` instead
    of degrading to 8-row tiles or one giant block.
    """
    if n >= target:
        tile = target
    else:
        tile = max(8, ((n + 7) // 8) * 8)
    padded = ((n + tile - 1) // tile) * tile
    return tile, padded


def _lane_tile(n, target=256):
    """Lane-dim tile: a divisor of n that is a multiple of 128, else full n."""
    t = target
    while t >= 128:
        if n >= t and n % t == 0:
            return t
        t //= 2
    return n  # full extent (block dim == array dim is always legal)


@functools.lru_cache(maxsize=None)
def _vmem_limit_bytes():
    """~85% of this generation's physical VMEM (None -> compiler default)."""
    try:
        cap = getattr(pltpu.get_tpu_info(), "vmem_capacity_bytes", None)
        if cap:
            return int(cap * 0.85)
    except Exception:
        pass
    return None


def _compiler_params(dim_sems):
    kwargs = dict(dimension_semantics=dim_sems)
    lim = _vmem_limit_bytes()
    if lim is not None:
        kwargs["vmem_limit_bytes"] = lim
    return pltpu.CompilerParams(**kwargs)


# ---------------------------------------------------------------------------
# Pallas kernels
# ---------------------------------------------------------------------------

def _linear_kernel(x_ref, wt_ref, b_ref, o_ref):
    # x: (tm, Din) f32, wt: (Din, tn) pre-transposed weight, b: (1, tn).
    # TODO(synk): add a Din (K-axis) grid + pl.when-init accumulator for very
    #             large Din; full-Din blocks are fine for moderate d_model.
    acc = jnp.dot(x_ref[...], wt_ref[...], preferred_element_type=jnp.float32)
    o_ref[...] = (acc + b_ref[...]).astype(o_ref.dtype)


def _flash_attn_kernel(q_ref, k_ref, v_ref, o_ref, m_sc, l_sc, acc_sc,
                       *, n_head, scale, kv_len, tkv, kv_padded):
    """One (q-tile, kv-tile) step of online-softmax attention, all heads.

    q: (tq, D), k/v: (tkv, D), o: (tq, D).
    Scratch carried across the trailing "arbitrary" kv grid axis:
      m_sc: (n_head, tq, 1) running max, l_sc: (n_head, tq, 1) running denom,
      acc_sc: (tq, D) unnormalized output accumulator (also the concat buffer).
    """
    j = pl.program_id(2)

    @pl.when(j == 0)
    def _():
        m_sc[...] = jnp.full_like(m_sc, -jnp.inf)
        l_sc[...] = jnp.zeros_like(l_sc)
        acc_sc[...] = jnp.zeros_like(acc_sc)

    # Scale q once per (tq, D) block (not per (tq, L) score), then feed the MXU
    # bf16 operands with f32 accumulation; softmax math stays f32.
    q_all = (q_ref[...] * scale).astype(jnp.bfloat16)
    k_all = k_ref[...].astype(jnp.bfloat16)
    v_all = v_ref[...].astype(jnp.bfloat16)

    d_model = q_all.shape[-1]
    dh = d_model // n_head

    if kv_padded:  # static: compiled out when L is already a tile multiple
        kv_pos = j * tkv + lax.broadcasted_iota(jnp.int32, (1, tkv), 1)
        kv_valid = kv_pos < kv_len                      # (1, tkv)

    for h in range(n_head):                              # static head unroll
        sl = slice(h * dh, (h + 1) * dh)
        # q @ k.T as a last-dim contraction: no transposed K tile.
        s = lax.dot_general(q_all[:, sl], k_all[:, sl],
                            (((1,), (1,)), ((), ())),
                            preferred_element_type=jnp.float32)   # (tq, tkv)
        if kv_padded:
            s = jnp.where(kv_valid, s, -jnp.inf)

        m_prev = m_sc[h]                                 # (tq, 1)
        m_new = jnp.maximum(m_prev, jnp.max(s, axis=-1, keepdims=True))
        alpha = jnp.exp(m_prev - m_new)                  # rescale old state
        p = jnp.exp(s - m_new)                           # (tq, tkv), f32
        l_sc[h] = alpha * l_sc[h] + jnp.sum(p, axis=-1, keepdims=True)
        pv = jnp.dot(p.astype(jnp.bfloat16), v_all[:, sl],
                     preferred_element_type=jnp.float32)  # (tq, dh)
        acc_sc[:, sl] = alpha * acc_sc[:, sl] + pv
        m_sc[h] = m_new

    @pl.when(j == pl.num_programs(2) - 1)
    def _():
        # Deferred softmax normalization on (tq, dh) per head, then one
        # lane-dense (tq, D) store (fused head concat).
        for h in range(n_head):
            sl = slice(h * dh, (h + 1) * dh)
            acc_sc[:, sl] = acc_sc[:, sl] * pl.reciprocal(l_sc[h], approx=True)
        o_ref[...] = acc_sc[...].astype(o_ref.dtype)


# ---------------------------------------------------------------------------
# Wrappers calling pallas_call
# ---------------------------------------------------------------------------

def pallas_linear(x2d, w, b, *, tm_target=512, tn_target=256):
    """y = x2d @ w.T + b (PyTorch nn.Linear), row- and Dout-tiled."""
    n_rows, d_in = x2d.shape
    d_out = w.shape[0]
    tm, n_pad = _row_tile(n_rows, tm_target)
    tn = _lane_tile(d_out, tn_target)

    xp = x2d if n_pad == n_rows else jnp.pad(x2d, ((0, n_pad - n_rows), (0, 0)))
    # One-time transpose of static parameters (host-side at init in a real
    # deployment) so the kernel rhs is a standard (Din, tn) tile for the MXU.
    wt = w.T
    b2 = b.reshape(1, d_out)

    grid = (n_pad // tm, d_out // tn)   # row axis outer -> x block reused over tn sweep
    out = pl.pallas_call(
        _linear_kernel,
        out_shape=jax.ShapeDtypeStruct((n_pad, d_out), jnp.float32),
        grid=grid,
        in_specs=[
            pl.BlockSpec((tm, d_in), lambda i, j: (i, 0)),
            pl.BlockSpec((d_in, tn), lambda i, j: (0, j)),
            pl.BlockSpec((1, tn), lambda i, j: (0, j)),
        ],
        out_specs=pl.BlockSpec((tm, tn), lambda i, j: (i, j)),
        compiler_params=_compiler_params(("parallel", "parallel")),
        cost_estimate=pl.CostEstimate(
            flops=2 * n_pad * d_in * d_out,
            transcendentals=0,
            bytes_accessed=4 * (n_pad * d_in
                                + (n_pad // tm) * d_in * d_out
                                + d_out + n_pad * d_out),
        ),
    )(xp, wt, b2)
    return out if n_pad == n_rows else out[:n_rows]


def pallas_flash_attention(qp, kp, vp, n_head, *, tq_target=256, tkv_target=256):
    """Fused head-split + flash attention + head-concat on (B, L, D) tensors."""
    B, L, D = qp.shape
    dh = D // n_head
    scale = 1.0 / math.sqrt(dh)

    tq, l_q = _row_tile(L, tq_target)      # >=256 target keeps the MXU output
    tkv, l_kv = _row_tile(L, tkv_target)   # dims saturated (QK^T contracts dh)

    q_in = qp if l_q == L else jnp.pad(qp, ((0, 0), (0, l_q - L), (0, 0)))
    k_in = kp if l_kv == L else jnp.pad(kp, ((0, 0), (0, l_kv - L), (0, 0)))
    v_in = vp if l_kv == L else jnp.pad(vp, ((0, 0), (0, l_kv - L), (0, 0)))

    kernel = functools.partial(
        _flash_attn_kernel, n_head=n_head, scale=scale,
        kv_len=L, tkv=tkv, kv_padded=(l_kv != L))

    grid = (B, l_q // tq, l_kv // tkv)     # kv axis last, "arbitrary"
    out = pl.pallas_call(
        kernel,
        out_shape=jax.ShapeDtypeStruct((B, l_q, D), jnp.float32),
        grid=grid,
        in_specs=[
            pl.BlockSpec((None, tq, D), lambda b, i, j: (b, i, 0)),
            pl.BlockSpec((None, tkv, D), lambda b, i, j: (b, j, 0)),
            pl.BlockSpec((None, tkv, D), lambda b, i, j: (b, j, 0)),
        ],
        out_specs=pl.BlockSpec((None, tq, D), lambda b, i, j: (b, i, 0)),
        scratch_shapes=[
            pltpu.VMEM((n_head, tq, 1), jnp.float32),   # running max
            pltpu.VMEM((n_head, tq, 1), jnp.float32),   # running denominator
            pltpu.VMEM((tq, D), jnp.float32),           # unnormalized acc / concat
        ],
        compiler_params=_compiler_params(("parallel", "parallel", "arbitrary")),
        cost_estimate=pl.CostEstimate(
            flops=4 * B * l_q * l_kv * D,
            transcendentals=B * n_head * l_q * l_kv,
            bytes_accessed=4 * (2 * B * l_q * D
                                + 2 * B * l_kv * D * (l_q // tq)),
        ),
    )(q_in, k_in, v_in)
    return out if l_q == L else out[:, :L, :]


def multi_head_attention(q, k, v, params, n_head):
    """Forward pass of the PyTorch MultiHeadAttention module (mask=None)."""
    B, L, D = q.shape
    N = B * L

    # Distinct q/k/v inputs: three row-tiled linear calls (no (3, N, D) HBM
    # stack of activations).
    qp = pallas_linear(q.reshape(N, D), params["w_q"], params["b_q"]).reshape(B, L, D)
    kp = pallas_linear(k.reshape(N, D), params["w_k"], params["b_k"]).reshape(B, L, D)
    vp = pallas_linear(v.reshape(N, D), params["w_v"], params["b_v"]).reshape(B, L, D)

    # fused split -> flash attention -> concat (no (B, H, L, dh) HBM transposes)
    attn = pallas_flash_attention(qp, kp, vp, n_head)

    # output projection
    y = pallas_linear(attn.reshape(N, D), params["w_concat"],
                      params["b_concat"]).reshape(B, L, D)
    return y


# ---------------------------------------------------------------------------
# Deterministic parameter init (mimics nn.Linear uniform(-1/sqrt(fan_in), .))
# ---------------------------------------------------------------------------

def init_params(key, d_model):
    bound = 1.0 / math.sqrt(d_model)
    params = {}
    for name in ("q", "k", "v", "concat"):
        key, kw, kb = jax.random.split(key, 3)
        params["w_" + name] = jax.random.uniform(
            kw, (d_model, d_model), jnp.float32, -bound, bound)
        params["b_" + name] = jax.random.uniform(
            kb, (d_model,), jnp.float32, -bound, bound)
    return params


# ---------------------------------------------------------------------------
# Pure-JAX reference for a sanity check
# ---------------------------------------------------------------------------

def reference_mha(q, k, v, params, n_head):
    B, L, D = q.shape
    dh = D // n_head

    def lin(x, w, b):
        return x @ w.T + b

    def split(t):
        return t.reshape(B, L, n_head, dh).transpose(0, 2, 1, 3)

    qs = split(lin(q, params["w_q"], params["b_q"]))
    ks = split(lin(k, params["w_k"], params["b_k"]))
    vs = split(lin(v, params["w_v"], params["b_v"]))
    s = jnp.einsum("bhqd,bhkd->bhqk", qs, ks) / math.sqrt(dh)
    p = jax.nn.softmax(s, axis=-1)
    o = jnp.einsum("bhqk,bhkd->bhqd", p, vs)
    cat = o.transpose(0, 2, 1, 3).reshape(B, L, D)
    return lin(cat, params["w_concat"], params["b_concat"])


# ---------------------------------------------------------------------------
# Main
# ---------------------------------------------------------------------------

if __name__ == "__main__":
    d_model, n_head = 32, 4
    mha = jax.jit(multi_head_attention, static_argnames="n_head")

    # bf16 MXU operands in attention introduce ~1e-2 relative drift vs the
    # pure-f32 reference; softmax/accumulation stay f32.
    TOL = dict(atol=2e-2, rtol=2e-2)

    # --- case 1: tile-aligned shapes -------------------------------------
    B, L = 2, 8
    key = jax.random.PRNGKey(0)
    key, kq, kk, kv, kp = jax.random.split(key, 5)
    q = jax.random.normal(kq, (B, L, d_model), jnp.float32)
    k = jax.random.normal(kk, (B, L, d_model), jnp.float32)
    v = jax.random.normal(kv, (B, L, d_model), jnp.float32)
    params = init_params(kp, d_model)

    out = jax.block_until_ready(mha(q, k, v, params, n_head=n_head))
    ref = reference_mha(q, k, v, params, n_head)
    assert out.shape == (B, L, d_model)
    assert jnp.allclose(out, ref, **TOL), "mismatch vs reference (aligned)"

    # --- case 2: ragged length (exercises the padded/masked KV path) -----
    B2, L2 = 1, 12
    key, kq2, kk2, kv2 = jax.random.split(key, 4)
    q2 = jax.random.normal(kq2, (B2, L2, d_model), jnp.float32)
    k2 = jax.random.normal(kk2, (B2, L2, d_model), jnp.float32)
    v2 = jax.random.normal(kv2, (B2, L2, d_model), jnp.float32)

    out2 = jax.block_until_ready(mha(q2, k2, v2, params, n_head=n_head))
    ref2 = reference_mha(q2, k2, v2, params, n_head)
    assert out2.shape == (B2, L2, d_model)
    assert jnp.allclose(out2, ref2, **TOL), "mismatch vs reference (ragged)"

    print("KERNEL_OK")
</pallas_src>

<mosaic_0001>
module attributes {stable_mosaic.version = 11 : i64} {
  func.func @_linear_kernel(%arg0: i32, %arg1: i32, %arg2: memref<16x32xf32, #tpu.memory_space<vmem>>, %arg3: memref<32x32xf32, #tpu.memory_space<vmem>>, %arg4: memref<1x32xf32, #tpu.memory_space<vmem>>, %arg5: memref<16x32xf32, #tpu.memory_space<vmem>>) attributes {dimension_semantics = [#tpu.dimension_semantics<parallel>, #tpu.dimension_semantics<parallel>], iteration_bounds = array<i64: 1, 1>, scalar_prefetch = 0 : i64, scratch_operands = 0 : i64, tpu.core_type = #tpu.core_type<tc>, window_params = [{transform_indices = @transform_0, window_bounds = array<i64: 16, 32>}, {transform_indices = @transform_1, window_bounds = array<i64: 32, 32>}, {transform_indices = @transform_2, window_bounds = array<i64: 1, 32>}, {transform_indices = @transform_3, window_bounds = array<i64: 16, 32>}]} {
    %c0 = arith.constant 0 : index
    %c0_0 = arith.constant 0 : index
    %0 = vector.load %arg2[%c0, %c0_0] : memref<16x32xf32, #tpu.memory_space<vmem>>, vector<16x32xf32>
    %c0_1 = arith.constant 0 : index
    %c0_2 = arith.constant 0 : index
    %1 = vector.load %arg3[%c0_1, %c0_2] : memref<32x32xf32, #tpu.memory_space<vmem>>, vector<32x32xf32>
    %cst = arith.constant dense<0.000000e+00> : vector<16x32xf32>
    %2 = tpu.matmul %0, %1, %cst {dimension_numbers = #tpu.dot_dimension_numbers<[1], [0], [0], [1], [0, 0, 1, 1], [], []>} : vector<16x32xf32>, vector<32x32xf32>, vector<16x32xf32> -> vector<16x32xf32>
    %c0_3 = arith.constant 0 : index
    %c0_4 = arith.constant 0 : index
    %3 = vector.load %arg4[%c0_3, %c0_4] : memref<1x32xf32, #tpu.memory_space<vmem>>, vector<1x32xf32>
    %4 = vector.broadcast %3 : vector<1x32xf32> to vector<16x32xf32>
    %5 = arith.addf %2, %4 : vector<16x32xf32>
    %c0_5 = arith.constant 0 : index
    %c0_6 = arith.constant 0 : index
    %6 = vector.load %arg5[%c0_5, %c0_6] : memref<16x32xf32, #tpu.memory_space<vmem>>, vector<16x32xf32>
    tpu.vector_store %arg5[%c0_5, %c0_6], %5 {strides = array<i32>} : memref<16x32xf32, #tpu.memory_space<vmem>>, vector<16x32xf32>,
    return
  }
  func.func @transform_0(%arg0: i32, %arg1: i32) -> (i32, i32) {
    %c0_i32 = arith.constant 0 : i32
    %c0_i32_0 = arith.constant 0 : i32
    return %arg0, %c0_i32 : i32, i32
  }
  func.func @transform_1(%arg0: i32, %arg1: i32) -> (i32, i32) {
    %c0_i32 = arith.constant 0 : i32
    %c0_i32_0 = arith.constant 0 : i32
    return %c0_i32, %arg1 : i32, i32
  }
  func.func @transform_2(%arg0: i32, %arg1: i32) -> (i32, i32) {
    %c0_i32 = arith.constant 0 : i32
    %c0_i32_0 = arith.constant 0 : i32
    return %c0_i32, %arg1 : i32, i32
  }
  func.func @transform_3(%arg0: i32, %arg1: i32) -> (i32, i32) {
    %c0_i32 = arith.constant 0 : i32
    return %arg0, %arg1 : i32, i32
  }
}

module attributes {stable_mosaic.version = 11 : i64} {
  func.func @_linear_kernel(%arg0: i32, %arg1: i32, %arg2: memref<16x32xf32, #tpu.memory_space<vmem>>, %arg3: memref<32x32xf32, #tpu.memory_space<vmem>>, %arg4: memref<1x32xf32, #tpu.memory_space<vmem>>, %arg5: memref<16x32xf32, #tpu.memory_space<vmem>>) attributes {dimension_semantics = [#tpu.dimension_semantics<parallel>, #tpu.dimension_semantics<parallel>], iteration_bounds = array<i64: 1, 1>, scalar_prefetch = 0 : i64, scratch_operands = 0 : i64, tpu.core_type = #tpu.core_type<tc>, window_params = [{transform_indices = @transform_0, window_bounds = array<i64: 16, 32>}, {transform_indices = @transform_1, window_bounds = array<i64: 32, 32>}, {transform_indices = @transform_2, window_bounds = array<i64: 1, 32>}, {transform_indices = @transform_3, window_bounds = array<i64: 16, 32>}]} {
    %c0 = arith.constant 0 : index
    %c0_0 = arith.constant 0 : index
    %0 = vector.load %arg2[%c0, %c0_0] : memref<16x32xf32, #tpu.memory_space<vmem>>, vector<16x32xf32>
    %c0_1 = arith.constant 0 : index
    %c0_2 = arith.constant 0 : index
    %1 = vector.load %arg3[%c0_1, %c0_2] : memref<32x32xf32, #tpu.memory_space<vmem>>, vector<32x32xf32>
    %cst = arith.constant dense<0.000000e+00> : vector<16x32xf32>
    %2 = tpu.matmul %0, %1, %cst {dimension_numbers = #tpu.dot_dimension_numbers<[1], [0], [0], [1], [0, 0, 1, 1], [], []>} : vector<16x32xf32>, vector<32x32xf32>, vector<16x32xf32> -> vector<16x32xf32>
    %c0_3 = arith.constant 0 : index
    %c0_4 = arith.constant 0 : index
    %3 = vector.load %arg4[%c0_3, %c0_4] : memref<1x32xf32, #tpu.memory_space<vmem>>, vector<1x32xf32>
    %4 = vector.broadcast %3 : vector<1x32xf32> to vector<16x32xf32>
    %5 = arith.addf %2, %4 : vector<16x32xf32>
    %c0_5 = arith.constant 0 : index
    %c0_6 = arith.constant 0 : index
    %6 = vector.load %arg5[%c0_5, %c0_6] : memref<16x32xf32, #tpu.memory_space<vmem>>, vector<16x32xf32>
    tpu.vector_store %arg5[%c0_5, %c0_6], %5 {strides = array<i32>} : memref<16x32xf32, #tpu.memory_space<vmem>>, vector<16x32xf32>,
    return
  }
  func.func @transform_0(%arg0: i32, %arg1: i32) -> (i32, i32) {
    %c0_i32 = arith.constant 0 : i32
    %c0_i32_0 = arith.constant 0 : i32
    return %arg0, %c0_i32 : i32, i32
  }
  func.func @transform_1(%arg0: i32, %arg1: i32) -> (i32, i32) {
    %c0_i32 = arith.constant 0 : i32
    %c0_i32_0 = arith.constant 0 : i32
    return %c0_i32, %arg1 : i32, i32
  }
  func.func @transform_2(%arg0: i32, %arg1: i32) -> (i32, i32) {
    %c0_i32 = arith.constant 0 : i32
    %c0_i32_0 = arith.constant 0 : i32
    return %c0_i32, %arg1 : i32, i32
  }
  func.func @transform_3(%arg0: i32, %arg1: i32) -> (i32, i32) {
    %c0_i32 = arith.constant 0 : i32
    return %arg0, %arg1 : i32, i32
  }
}

module attributes {stable_mosaic.version = 11 : i64} {
  func.func @_flash_attn_kernel(%arg0: i32, %arg1: i32, %arg2: i32, %arg3: memref<1x8x32xf32, #tpu.memory_space<vmem>>, %arg4: memref<1x8x32xf32, #tpu.memory_space<vmem>>, %arg5: memref<1x8x32xf32, #tpu.memory_space<vmem>>, %arg6: memref<1x8x32xf32, #tpu.memory_space<vmem>>, %arg7: memref<4x8x1xf32, #tpu.memory_space<vmem>>, %arg8: memref<4x8x1xf32, #tpu.memory_space<vmem>>, %arg9: memref<8x32xf32, #tpu.memory_space<vmem>>) attributes {dimension_semantics = [#tpu.dimension_semantics<parallel>, #tpu.dimension_semantics<parallel>, #tpu.dimension_semantics<arbitrary>], iteration_bounds = array<i64: 2, 1, 1>, scalar_prefetch = 0 : i64, scratch_operands = 3 : i64, tpu.core_type = #tpu.core_type<tc>, window_params = [{transform_indices = @transform_0, window_bounds = array<i64: 1, 8, 32>}, {transform_indices = @transform_1, window_bounds = array<i64: 1, 8, 32>}, {transform_indices = @transform_2, window_bounds = array<i64: 1, 8, 32>}, {transform_indices = @transform_3, window_bounds = array<i64: 1, 8, 32>}]} {
    %c0_i32 = arith.constant 0 : i32
    %0 = arith.cmpi eq, %arg2, %c0_i32 : i32
    %1 = arith.extui %0 : i1 to i32
    %c0_i32_0 = arith.constant 0 : i32
    %2 = arith.cmpi ne, %1, %c0_i32_0 : i32
    scf.if %2 {
      %cst_85 = arith.constant 0xFF800000 : f32
      %149 = vector.broadcast %cst_85 : f32 to vector<4x8x1xf32>
      %c0_86 = arith.constant 0 : index
      %c0_87 = arith.constant 0 : index
      %c0_88 = arith.constant 0 : index
      %150 = vector.load %arg7[%c0_86, %c0_87, %c0_88] : memref<4x8x1xf32, #tpu.memory_space<vmem>>, vector<4x8x1xf32>
      tpu.vector_store %arg7[%c0_86, %c0_87, %c0_88], %149 {strides = array<i32>} : memref<4x8x1xf32, #tpu.memory_space<vmem>>, vector<4x8x1xf32>,
      %cst_89 = arith.constant 0.000000e+00 : f32
      %151 = vector.broadcast %cst_89 : f32 to vector<4x8x1xf32>
      %c0_90 = arith.constant 0 : index
      %c0_91 = arith.constant 0 : index
      %c0_92 = arith.constant 0 : index
      %152 = vector.load %arg8[%c0_90, %c0_91, %c0_92] : memref<4x8x1xf32, #tpu.memory_space<vmem>>, vector<4x8x1xf32>
      tpu.vector_store %arg8[%c0_90, %c0_91, %c0_92], %151 {strides = array<i32>} : memref<4x8x1xf32, #tpu.memory_space<vmem>>, vector<4x8x1xf32>,
      %cst_93 = arith.constant 0.000000e+00 : f32
      %153 = vector.broadcast %cst_93 : f32 to vector<8x32xf32>
      %c0_94 = arith.constant 0 : index
      %c0_95 = arith.constant 0 : index
      %154 = vector.load %arg9[%c0_94, %c0_95] : memref<8x32xf32, #tpu.memory_space<vmem>>, vector<8x32xf32>
      tpu.vector_store %arg9[%c0_94, %c0_95], %153 {strides = array<i32>} : memref<8x32xf32, #tpu.memory_space<vmem>>, vector<8x32xf32>,
    } else {
    }
    %c0 = arith.constant 0 : index
    %c0_1 = arith.constant 0 : index
    %c0_2 = arith.constant 0 : index
    %3 = vector.load %arg3[%c0, %c0_1, %c0_2] : memref<1x8x32xf32, #tpu.memory_space<vmem>>, vector<1x8x32xf32>
    %4 = vector.shape_cast %3 : vector<1x8x32xf32> to vector<8x32xf32>
    %cst = arith.constant 0.353553385 : f32
    %5 = vector.broadcast %cst : f32 to vector<8x32xf32>
    %6 = arith.mulf %4, %5 : vector<8x32xf32>
    %7 = arith.truncf %6 : vector<8x32xf32> to vector<8x32xbf16>
    %c0_3 = arith.constant 0 : index
    %c0_4 = arith.constant 0 : index
    %c0_5 = arith.constant 0 : index
    %8 = vector.load %arg4[%c0_3, %c0_4, %c0_5] : memref<1x8x32xf32, #tpu.memory_space<vmem>>, vector<1x8x32xf32>
    %9 = vector.shape_cast %8 : vector<1x8x32xf32> to vector<8x32xf32>
    %10 = arith.truncf %9 : vector<8x32xf32> to vector<8x32xbf16>
    %c0_6 = arith.constant 0 : index
    %c0_7 = arith.constant 0 : index
    %c0_8 = arith.constant 0 : index
    %11 = vector.load %arg5[%c0_6, %c0_7, %c0_8] : memref<1x8x32xf32, #tpu.memory_space<vmem>>, vector<1x8x32xf32>
    %12 = vector.shape_cast %11 : vector<1x8x32xf32> to vector<8x32xf32>
    %13 = arith.truncf %12 : vector<8x32xf32> to vector<8x32xbf16>
    %14 = vector.extract_strided_slice %7 {offsets = [0, 0], sizes = [8, 8], strides = [1, 1]} : vector<8x32xbf16> to vector<8x8xbf16>
    %15 = vector.extract_strided_slice %10 {offsets = [0, 0], sizes = [8, 8], strides = [1, 1]} : vector<8x32xbf16> to vector<8x8xbf16>
    %cst_9 = arith.constant dense<0.000000e+00> : vector<8x8xf32>
    %16 = tpu.matmul %14, %15, %cst_9 {dimension_numbers = #tpu.dot_dimension_numbers<[1], [1], [0], [0], [0, 0, 1, 0], [], []>} : vector<8x8xbf16>, vector<8x8xbf16>, vector<8x8xf32> -> vector<8x8xf32>
    %c0_10 = arith.constant 0 : index
    %c0_11 = arith.constant 0 : index
    %c0_12 = arith.constant 0 : index
    %17 = vector.load %arg7[%c0_10, %c0_11, %c0_12] : memref<4x8x1xf32, #tpu.memory_space<vmem>>, vector<1x8x1xf32>
    %18 = vector.shape_cast %17 : vector<1x8x1xf32> to vector<8x1xf32>
    %cst_13 = arith.constant dense<0xFF800000> : vector<8xf32>
    %19 = vector.multi_reduction <maximumf>, %16, %cst_13 [1] : vector<8x8xf32> to vector<8xf32>
    %20 = vector.shape_cast %19 : vector<8xf32> to vector<8x1xf32>
    %21 = arith.maximumf %18, %20 : vector<8x1xf32>
    %22 = arith.subf %18, %21 : vector<8x1xf32>
    %23 = math.exp %22 : vector<8x1xf32>
    %24 = vector.broadcast %21 : vector<8x1xf32> to vector<8x8xf32>
    %25 = arith.subf %16, %24 : vector<8x8xf32>
    %26 = math.exp %25 : vector<8x8xf32>
    %c0_14 = arith.constant 0 : index
    %c0_15 = arith.constant 0 : index
    %c0_16 = arith.constant 0 : index
    %27 = vector.load %arg8[%c0_14, %c0_15, %c0_16] : memref<4x8x1xf32, #tpu.memory_space<vmem>>, vector<1x8x1xf32>
    %28 = vector.shape_cast %27 : vector<1x8x1xf32> to vector<8x1xf32>
    %29 = arith.mulf %23, %28 : vector<8x1xf32>
    %cst_17 = arith.constant dense<0.000000e+00> : vector<8xf32>
    %30 = vector.multi_reduction <add>, %26, %cst_17 [1] : vector<8x8xf32> to vector<8xf32>
    %31 = vector.shape_cast %30 : vector<8xf32> to vector<8x1xf32>
    %32 = arith.addf %29, %31 : vector<8x1xf32>
    %c0_18 = arith.constant 0 : index
    %c0_19 = arith.constant 0 : index
    %c0_20 = arith.constant 0 : index
    %33 = vector.load %arg8[%c0_18, %c0_19, %c0_20] : memref<4x8x1xf32, #tpu.memory_space<vmem>>, vector<1x8x1xf32>
    %34 = vector.shape_cast %33 : vector<1x8x1xf32> to vector<8x1xf32>
    %35 = vector.shape_cast %32 : vector<8x1xf32> to vector<1x8x1xf32>
    tpu.vector_store %arg8[%c0_18, %c0_19, %c0_20], %35 {strides = array<i32>} : memref<4x8x1xf32, #tpu.memory_space<vmem>>, vector<1x8x1xf32>,
    %36 = arith.truncf %26 : vector<8x8xf32> to vector<8x8xbf16>
    %37 = vector.extract_strided_slice %13 {offsets = [0, 0], sizes = [8, 8], strides = [1, 1]} : vector<8x32xbf16> to vector<8x8xbf16>
    %cst_21 = arith.constant dense<0.000000e+00> : vector<8x8xf32>
    %38 = tpu.matmul %36, %37, %cst_21 {dimension_numbers = #tpu.dot_dimension_numbers<[1], [0], [0], [1], [0, 0, 1, 1], [], []>} : vector<8x8xbf16>, vector<8x8xbf16>, vector<8x8xf32> -> vector<8x8xf32>
    %c0_22 = arith.constant 0 : index
    %c0_23 = arith.constant 0 : index
    %39 = vector.load %arg9[%c0_22, %c0_23] : memref<8x32xf32, #tpu.memory_space<vmem>>, vector<8x8xf32>
    %40 = vector.broadcast %23 : vector<8x1xf32> to vector<8x8xf32>
    %41 = arith.mulf %40, %39 : vector<8x8xf32>
    %42 = arith.addf %41, %38 : vector<8x8xf32>
    %c0_24 = arith.constant 0 : index
    %c0_25 = arith.constant 0 : index
    %43 = vector.load %arg9[%c0_24, %c0_25] : memref<8x32xf32, #tpu.memory_space<vmem>>, vector<8x8xf32>
    tpu.vector_store %arg9[%c0_24, %c0_25], %42 {strides = array<i32>} : memref<8x32xf32, #tpu.memory_space<vmem>>, vector<8x8xf32>,
    %c0_26 = arith.constant 0 : index
    %c0_27 = arith.constant 0 : index
    %c0_28 = arith.constant 0 : index
    %44 = vector.load %arg7[%c0_26, %c0_27, %c0_28] : memref<4x8x1xf32, #tpu.memory_space<vmem>>, vector<1x8x1xf32>
    %45 = vector.shape_cast %44 : vector<1x8x1xf32> to vector<8x1xf32>
    %46 = vector.shape_cast %21 : vector<8x1xf32> to vector<1x8x1xf32>
    tpu.vector_store %arg7[%c0_26, %c0_27, %c0_28], %46 {strides = array<i32>} : memref<4x8x1xf32, #tpu.memory_space<vmem>>, vector<1x8x1xf32>,
    %47 = vector.extract_strided_slice %7 {offsets = [0, 8], sizes = [8, 8], strides = [1, 1]} : vector<8x32xbf16> to vector<8x8xbf16>
    %48 = vector.extract_strided_slice %10 {offsets = [0, 8], sizes = [8, 8], strides = [1, 1]} : vector<8x32xbf16> to vector<8x8xbf16>
    %cst_29 = arith.constant dense<0.000000e+00> : vector<8x8xf32>
    %49 = tpu.matmul %47, %48, %cst_29 {dimension_numbers = #tpu.dot_dimension_numbers<[1], [1], [0], [0], [0, 0, 1, 0], [], []>} : vector<8x8xbf16>, vector<8x8xbf16>, vector<8x8xf32> -> vector<8x8xf32>
    %c1 = arith.constant 1 : index
    %c0_30 = arith.constant 0 : index
    %c0_31 = arith.constant 0 : index
    %50 = vector.load %arg7[%c1, %c0_30, %c0_31] : memref<4x8x1xf32, #tpu.memory_space<vmem>>, vector<1x8x1xf32>
    %51 = vector.shape_cast %50 : vector<1x8x1xf32> to vector<8x1xf32>
    %cst_32 = arith.constant dense<0xFF800000> : vector<8xf32>
    %52 = vector.multi_reduction <maximumf>, %49, %cst_32 [1] : vector<8x8xf32> to vector<8xf32>
    %53 = vector.shape_cast %52 : vector<8xf32> to vector<8x1xf32>
    %54 = arith.maximumf %51, %53 : vector<8x1xf32>
    %55 = arith.subf %51, %54 : vector<8x1xf32>
    %56 = math.exp %55 : vector<8x1xf32>
    %57 = vector.broadcast %54 : vector<8x1xf32> to vector<8x8xf32>
    %58 = arith.subf %49, %57 : vector<8x8xf32>
    %59 = math.exp %58 : vector<8x8xf32>
    %c1_33 = arith.constant 1 : index
    %c0_34 = arith.constant 0 : index
    %c0_35 = arith.constant 0 : index
    %60 = vector.load %arg8[%c1_33, %c0_34, %c0_35] : memref<4x8x1xf32, #tpu.memory_space<vmem>>, vector<1x8x1xf32>
    %61 = vector.shape_cast %60 : vector<1x8x1xf32> to vector<8x1xf32>
    %62 = arith.mulf %56, %61 : vector<8x1xf32>
    %cst_36 = arith.constant dense<0.000000e+00> : vector<8xf32>
    %63 = vector.multi_reduction <add>, %59, %cst_36 [1] : vector<8x8xf32> to vector<8xf32>
    %64 = vector.shape_cast %63 : vector<8xf32> to vector<8x1xf32>
    %65 = arith.addf %62, %64 : vector<8x1xf32>
    %c1_37 = arith.constant 1 : index
    %c0_38 = arith.constant 0 : index
    %c0_39 = arith.constant 0 : index
    %66 = vector.load %arg8[%c1_37, %c0_38, %c0_39] : memref<4x8x1xf32, #tpu.memory_space<vmem>>, vector<1x8x1xf32>
    %67 = vector.shape_cast %66 : vector<1x8x1xf32> to vector<8x1xf32>
    %68 = vector.shape_cast %65 : vector<8x1xf32> to vector<1x8x1xf32>
    tpu.vector_store %arg8[%c1_37, %c0_38, %c0_39], %68 {strides = array<i32>} : memref<4x8x1xf32, #tpu.memory_space<vmem>>, vector<1x8x1xf32>,
    %69 = arith.truncf %59 : vector<8x8xf32> to vector<8x8xbf16>
    %70 = vector.extract_strided_slice %13 {offsets = [0, 8], sizes = [8, 8], strides = [1, 1]} : vector<8x32xbf16> to vector<8x8xbf16>
    %cst_40 = arith.constant dense<0.000000e+00> : vector<8x8xf32>
    %71 = tpu.matmul %69, %70, %cst_40 {dimension_numbers = #tpu.dot_dimension_numbers<[1], [0], [0], [1], [0, 0, 1, 1], [], []>} : vector<8x8xbf16>, vector<8x8xbf16>, vector<8x8xf32> -> vector<8x8xf32>
    %c0_41 = arith.constant 0 : index
    %c8 = arith.constant 8 : index
    %72 = vector.load %arg9[%c0_41, %c8] : memref<8x32xf32, #tpu.memory_space<vmem>>, vector<8x8xf32>
    %73 = vector.broadcast %56 : vector<8x1xf32> to vector<8x8xf32>
    %74 = arith.mulf %73, %72 : vector<8x8xf32>
    %75 = arith.addf %74, %71 : vector<8x8xf32>
    %c0_42 = arith.constant 0 : index
    %c8_43 = arith.constant 8 : index
    %76 = vector.load %arg9[%c0_42, %c8_43] : memref<8x32xf32, #tpu.memory_space<vmem>>, vector<8x8xf32>
    tpu.vector_store %arg9[%c0_42, %c8_43], %75 {strides = array<i32>} : memref<8x32xf32, #tpu.memory_space<vmem>>, vector<8x8xf32>,
    %c1_44 = arith.constant 1 : index
    %c0_45 = arith.constant 0 : index
    %c0_46 = arith.constant 0 : index
    %77 = vector.load %arg7[%c1_44, %c0_45, %c0_46] : memref<4x8x1xf32, #tpu.memory_space<vmem>>, vector<1x8x1xf32>
    %78 = vector.shape_cast %77 : vector<1x8x1xf32> to vector<8x1xf32>
    %79 = vector.shape_cast %54 : vector<8x1xf32> to vector<1x8x1xf32>
    tpu.vector_store %arg7[%c1_44, %c0_45, %c0_46], %79 {strides = array<i32>} : memref<4x8x1xf32, #tpu.memory_space<vmem>>, vector<1x8x1xf32>,
    %80 = vector.extract_strided_slice %7 {offsets = [0, 16], sizes = [8, 8], strides = [1, 1]} : vector<8x32xbf16> to vector<8x8xbf16>
    %81 = vector.extract_strided_slice %10 {offsets = [0, 16], sizes = [8, 8], strides = [1, 1]} : vector<8x32xbf16> to vector<8x8xbf16>
    %cst_47 = arith.constant dense<0.000000e+00> : vector<8x8xf32>
    %82 = tpu.matmul %80, %81, %cst_47 {dimension_numbers = #tpu.dot_dimension_numbers<[1], [1], [0], [0], [0, 0, 1, 0], [], []>} : vector<8x8xbf16>, vector<8x8xbf16>, vector<8x8xf32> -> vector<8x8xf32>
    %c2 = arith.constant 2 : index
    %c0_48 = arith.constant 0 : index
    %c0_49 = arith.constant 0 : index
    %83 = vector.load %arg7[%c2, %c0_48, %c0_49] : memref<4x8x1xf32, #tpu.memory_space<vmem>>, vector<1x8x1xf32>
    %84 = vector.shape_cast %83 : vector<1x8x1xf32> to vector<8x1xf32>
    %cst_50 = arith.constant dense<0xFF800000> : vector<8xf32>
    %85 = vector.multi_reduction <maximumf>, %82, %cst_50 [1] : vector<8x8xf32> to vector<8xf32>
    %86 = vector.shape_cast %85 : vector<8xf32> to vector<8x1xf32>
    %87 = arith.maximumf %84, %86 : vector<8x1xf32>
    %88 = arith.subf %84, %87 : vector<8x1xf32>
    %89 = math.exp %88 : vector<8x1xf32>
    %90 = vector.broadcast %87 : vector<8x1xf32> to vector<8x8xf32>
    %91 = arith.subf %82, %90 : vector<8x8xf32>
    %92 = math.exp %91 : vector<8x8xf32>
    %c2_51 = arith.constant 2 : index
    %c0_52 = arith.constant 0 : index
    %c0_53 = arith.constant 0 : index
    %93 = vector.load %arg8[%c2_51, %c0_52, %c0_53] : memref<4x8x1xf32, #tpu.memory_space<vmem>>, vector<1x8x1xf32>
    %94 = vector.shape_cast %93 : vector<1x8x1xf32> to vector<8x1xf32>
    %95 = arith.mulf %89, %94 : vector<8x1xf32>
    %cst_54 = arith.constant dense<0.000000e+00> : vector<8xf32>
    %96 = vector.multi_reduction <add>, %92, %cst_54 [1] : vector<8x8xf32> to vector<8xf32>
    %97 = vector.shape_cast %96 : vector<8xf32> to vector<8x1xf32>
    %98 = arith.addf %95, %97 : vector<8x1xf32>
    %c2_55 = arith.constant 2 : index
    %c0_56 = arith.constant 0 : index
    %c0_57 = arith.constant 0 : index
    %99 = vector.load %arg8[%c2_55, %c0_56, %c0_57] : memref<4x8x1xf32, #tpu.memory_space<vmem>>, vector<1x8x1xf32>
    %100 = vector.shape_cast %99 : vector<1x8x1xf32> to vector<8x1xf32>
    %101 = vector.shape_cast %98 : vector<8x1xf32> to vector<1x8x1xf32>
    tpu.vector_store %arg8[%c2_55, %c0_56, %c0_57], %101 {strides = array<i32>} : memref<4x8x1xf32, #tpu.memory_space<vmem>>, vector<1x8x1xf32>,
    %102 = arith.truncf %92 : vector<8x8xf32> to vector<8x8xbf16>
    %103 = vector.extract_strided_slice %13 {offsets = [0, 16], sizes = [8, 8], strides = [1, 1]} : vector<8x32xbf16> to vector<8x8xbf16>
    %cst_58 = arith.constant dense<0.000000e+00> : vector<8x8xf32>
    %104 = tpu.matmul %102, %103, %cst_58 {dimension_numbers = #tpu.dot_dimension_numbers<[1], [0], [0], [1], [0, 0, 1, 1], [], []>} : vector<8x8xbf16>, vector<8x8xbf16>, vector<8x8xf32> -> vector<8x8xf32>
    %c0_59 = arith.constant 0 : index
    %c16 = arith.constant 16 : index
    %105 = vector.load %arg9[%c0_59, %c16] : memref<8x32xf32, #tpu.memory_space<vmem>>, vector<8x8xf32>
    %106 = vector.broadcast %89 : vector<8x1xf32> to vector<8x8xf32>
    %107 = arith.mulf %106, %105 : vector<8x8xf32>
    %108 = arith.addf %107, %104 : vector<8x8xf32>
    %c0_60 = arith.constant 0 : index
    %c16_61 = arith.constant 16 : index
    %109 = vector.load %arg9[%c0_60, %c16_61] : memref<8x32xf32, #tpu.memory_space<vmem>>, vector<8x8xf32>
    tpu.vector_store %arg9[%c0_60, %c16_61], %108 {strides = array<i32>} : memref<8x32xf32, #tpu.memory_space<vmem>>, vector<8x8xf32>,
    %c2_62 = arith.constant 2 : index
    %c0_63 = arith.constant 0 : index
    %c0_64 = arith.constant 0 : index
    %110 = vector.load %arg7[%c2_62, %c0_63, %c0_64] : memref<4x8x1xf32, #tpu.memory_space<vmem>>, vector<1x8x1xf32>
    %111 = vector.shape_cast %110 : vector<1x8x1xf32> to vector<8x1xf32>
    %112 = vector.shape_cast %87 : vector<8x1xf32> to vector<1x8x1xf32>
    tpu.vector_store %arg7[%c2_62, %c0_63, %c0_64], %112 {strides = array<i32>} : memref<4x8x1xf32, #tpu.memory_space<vmem>>, vector<1x8x1xf32>,
    %113 = vector.extract_strided_slice %7 {offsets = [0, 24], sizes = [8, 8], strides = [1, 1]} : vector<8x32xbf16> to vector<8x8xbf16>
    %114 = vector.extract_strided_slice %10 {offsets = [0, 24], sizes = [8, 8], strides = [1, 1]} : vector<8x32xbf16> to vector<8x8xbf16>
    %cst_65 = arith.constant dense<0.000000e+00> : vector<8x8xf32>
    %115 = tpu.matmul %113, %114, %cst_65 {dimension_numbers = #tpu.dot_dimension_numbers<[1], [1], [0], [0], [0, 0, 1, 0], [], []>} : vector<8x8xbf16>, vector<8x8xbf16>, vector<8x8xf32> -> vector<8x8xf32>
    %c3 = arith.constant 3 : index
    %c0_66 = arith.constant 0 : index
    %c0_67 = arith.constant 0 : index
    %116 = vector.load %arg7[%c3, %c0_66, %c0_67] : memref<4x8x1xf32, #tpu.memory_space<vmem>>, vector<1x8x1xf32>
    %117 = vector.shape_cast %116 : vector<1x8x1xf32> to vector<8x1xf32>
    %cst_68 = arith.constant dense<0xFF800000> : vector<8xf32>
    %118 = vector.multi_reduction <maximumf>, %115, %cst_68 [1] : vector<8x8xf32> to vector<8xf32>
    %119 = vector.shape_cast %118 : vector<8xf32> to vector<8x1xf32>
    %120 = arith.maximumf %117, %119 : vector<8x1xf32>
    %121 = arith.subf %117, %120 : vector<8x1xf32>
    %122 = math.exp %121 : vector<8x1xf32>
    %123 = vector.broadcast %120 : vector<8x1xf32> to vector<8x8xf32>
    %124 = arith.subf %115, %123 : vector<8x8xf32>
    %125 = math.exp %124 : vector<8x8xf32>
    %c3_69 = arith.constant 3 : index
    %c0_70 = arith.constant 0 : index
    %c0_71 = arith.constant 0 : index
    %126 = vector.load %arg8[%c3_69, %c0_70, %c0_71] : memref<4x8x1xf32, #tpu.memory_space<vmem>>, vector<1x8x1xf32>
    %127 = vector.shape_cast %126 : vector<1x8x1xf32> to vector<8x1xf32>
    %128 = arith.mulf %122, %127 : vector<8x1xf32>
    %cst_72 = arith.constant dense<0.000000e+00> : vector<8xf32>
    %129 = vector.multi_reduction <add>, %125, %cst_72 [1] : vector<8x8xf32> to vector<8xf32>
    %130 = vector.shape_cast %129 : vector<8xf32> to vector<8x1xf32>
    %131 = arith.addf %128, %130 : vector<8x1xf32>
    %c3_73 = arith.constant 3 : index
    %c0_74 = arith.constant 0 : index
    %c0_75 = arith.constant 0 : index
    %132 = vector.load %arg8[%c3_73, %c0_74, %c0_75] : memref<4x8x1xf32, #tpu.memory_space<vmem>>, vector<1x8x1xf32>
    %133 = vector.shape_cast %132 : vector<1x8x1xf32> to vector<8x1xf32>
    %134 = vector.shape_cast %131 : vector<8x1xf32> to vector<1x8x1xf32>
    tpu.vector_store %arg8[%c3_73, %c0_74, %c0_75], %134 {strides = array<i32>} : memref<4x8x1xf32, #tpu.memory_space<vmem>>, vector<1x8x1xf32>,
    %135 = arith.truncf %125 : vector<8x8xf32> to vector<8x8xbf16>
    %136 = vector.extract_strided_slice %13 {offsets = [0, 24], sizes = [8, 8], strides = [1, 1]} : vector<8x32xbf16> to vector<8x8xbf16>
    %cst_76 = arith.constant dense<0.000000e+00> : vector<8x8xf32>
    %137 = tpu.matmul %135, %136, %cst_76 {dimension_numbers = #tpu.dot_dimension_numbers<[1], [0], [0], [1], [0, 0, 1, 1], [], []>} : vector<8x8xbf16>, vector<8x8xbf16>, vector<8x8xf32> -> vector<8x8xf32>
    %c0_77 = arith.constant 0 : index
    %c24 = arith.constant 24 : index
    %138 = vector.load %arg9[%c0_77, %c24] : memref<8x32xf32, #tpu.memory_space<vmem>>, vector<8x8xf32>
    %139 = vector.broadcast %122 : vector<8x1xf32> to vector<8x8xf32>
    %140 = arith.mulf %139, %138 : vector<8x8xf32>
    %141 = arith.addf %140, %137 : vector<8x8xf32>
    %c0_78 = arith.constant 0 : index
    %c24_79 = arith.constant 24 : index
    %142 = vector.load %arg9[%c0_78, %c24_79] : memref<8x32xf32, #tpu.memory_space<vmem>>, vector<8x8xf32>
    tpu.vector_store %arg9[%c0_78, %c24_79], %141 {strides = array<i32>} : memref<8x32xf32, #tpu.memory_space<vmem>>, vector<8x8xf32>,
    %c3_80 = arith.constant 3 : index
    %c0_81 = arith.constant 0 : index
    %c0_82 = arith.constant 0 : index
    %143 = vector.load %arg7[%c3_80, %c0_81, %c0_82] : memref<4x8x1xf32, #tpu.memory_space<vmem>>, vector<1x8x1xf32>
    %144 = vector.shape_cast %143 : vector<1x8x1xf32> to vector<8x1xf32>
    %145 = vector.shape_cast %120 : vector<8x1xf32> to vector<1x8x1xf32>
    tpu.vector_store %arg7[%c3_80, %c0_81, %c0_82], %145 {strides = array<i32>} : memref<4x8x1xf32, #tpu.memory_space<vmem>>, vector<1x8x1xf32>,
    %c0_i32_83 = arith.constant 0 : i32
    %146 = arith.cmpi eq, %arg2, %c0_i32_83 : i32
    %147 = arith.extui %146 : i1 to i32
    %c0_i32_84 = arith.constant 0 : i32
    %148 = arith.cmpi ne, %147, %c0_i32_84 : i32
    scf.if %148 {
      %c0_85 = arith.constant 0 : index
      %c0_86 = arith.constant 0 : index
      %149 = vector.load %arg9[%c0_85, %c0_86] : memref<8x32xf32, #tpu.memory_space<vmem>>, vector<8x8xf32>
      %c0_87 = arith.constant 0 : index
      %c0_88 = arith.constant 0 : index
      %c0_89 = arith.constant 0 : index
      %150 = vector.load %arg8[%c0_87, %c0_88, %c0_89] : memref<4x8x1xf32, #tpu.memory_space<vmem>>, vector<1x8x1xf32>
      %151 = vector.shape_cast %150 : vector<1x8x1xf32> to vector<8x1xf32>
      %152 = tpu.reciprocal %151 {approx = true} : vector<8x1xf32> -> vector<8x1xf32>
      %153 = vector.broadcast %152 : vector<8x1xf32> to vector<8x8xf32>
      %154 = arith.mulf %149, %153 : vector<8x8xf32>
      %c0_90 = arith.constant 0 : index
      %c0_91 = arith.constant 0 : index
      %155 = vector.load %arg9[%c0_90, %c0_91] : memref<8x32xf32, #tpu.memory_space<vmem>>, vector<8x8xf32>
      tpu.vector_store %arg9[%c0_90, %c0_91], %154 {strides = array<i32>} : memref<8x32xf32, #tpu.memory_space<vmem>>, vector<8x8xf32>,
      %c0_92 = arith.constant 0 : index
      %c8_93 = arith.constant 8 : index
      %156 = vector.load %arg9[%c0_92, %c8_93] : memref<8x32xf32, #tpu.memory_space<vmem>>, vector<8x8xf32>
      %c1_94 = arith.constant 1 : index
      %c0_95 = arith.constant 0 : index
      %c0_96 = arith.constant 0 : index
      %157 = vector.load %arg8[%c1_94, %c0_95, %c0_96] : memref<4x8x1xf32, #tpu.memory_space<vmem>>, vector<1x8x1xf32>
      %158 = vector.shape_cast %157 : vector<1x8x1xf32> to vector<8x1xf32>
      %159 = tpu.reciprocal %158 {approx = true} : vector<8x1xf32> -> vector<8x1xf32>
      %160 = vector.broadcast %159 : vector<8x1xf32> to vector<8x8xf32>
      %161 = arith.mulf %156, %160 : vector<8x8xf32>
      %c0_97 = arith.constant 0 : index
      %c8_98 = arith.constant 8 : index
      %162 = vector.load %arg9[%c0_97, %c8_98] : memref<8x32xf32, #tpu.memory_space<vmem>>, vector<8x8xf32>
      tpu.vector_store %arg9[%c0_97, %c8_98], %161 {strides = array<i32>} : memref<8x32xf32, #tpu.memory_space<vmem>>, vector<8x8xf32>,
      %c0_99 = arith.constant 0 : index
      %c16_100 = arith.constant 16 : index
      %163 = vector.load %arg9[%c0_99, %c16_100] : memref<8x32xf32, #tpu.memory_space<vmem>>, vector<8x8xf32>
      %c2_101 = arith.constant 2 : index
      %c0_102 = arith.constant 0 : index
      %c0_103 = arith.constant 0 : index
      %164 = vector.load %arg8[%c2_101, %c0_102, %c0_103] : memref<4x8x1xf32, #tpu.memory_space<vmem>>, vector<1x8x1xf32>
      %165 = vector.shape_cast %164 : vector<1x8x1xf32> to vector<8x1xf32>
      %166 = tpu.reciprocal %165 {approx = true} : vector<8x1xf32> -> vector<8x1xf32>
      %167 = vector.broadcast %166 : vector<8x1xf32> to vector<8x8xf32>
      %168 = arith.mulf %163, %167 : vector<8x8xf32>
      %c0_104 = arith.constant 0 : index
      %c16_105 = arith.constant 16 : index
      %169 = vector.load %arg9[%c0_104, %c16_105] : memref<8x32xf32, #tpu.memory_space<vmem>>, vector<8x8xf32>
      tpu.vector_store %arg9[%c0_104, %c16_105], %168 {strides = array<i32>} : memref<8x32xf32, #tpu.memory_space<vmem>>, vector<8x8xf32>,
      %c0_106 = arith.constant 0 : index
      %c24_107 = arith.constant 24 : index
      %170 = vector.load %arg9[%c0_106, %c24_107] : memref<8x32xf32, #tpu.memory_space<vmem>>, vector<8x8xf32>
      %c3_108 = arith.constant 3 : index
      %c0_109 = arith.constant 0 : index
      %c0_110 = arith.constant 0 : index
      %171 = vector.load %arg8[%c3_108, %c0_109, %c0_110] : memref<4x8x1xf32, #tpu.memory_space<vmem>>, vector<1x8x1xf32>
      %172 = vector.shape_cast %171 : vector<1x8x1xf32> to vector<8x1xf32>
      %173 = tpu.reciprocal %172 {approx = true} : vector<8x1xf32> -> vector<8x1xf32>
      %174 = vector.broadcast %173 : vector<8x1xf32> to vector<8x8xf32>
      %175 = arith.mulf %170, %174 : vector<8x8xf32>
      %c0_111 = arith.constant 0 : index
      %c24_112 = arith.constant 24 : index
      %176 = vector.load %arg9[%c0_111, %c24_112] : memref<8x32xf32, #tpu.memory_space<vmem>>, vector<8x8xf32>
      tpu.vector_store %arg9[%c0_111, %c24_112], %175 {strides = array<i32>} : memref<8x32xf32, #tpu.memory_space<vmem>>, vector<8x8xf32>,
      %c0_113 = arith.constant 0 : index
      %c0_114 = arith.constant 0 : index
      %177 = vector.load %arg9[%c0_113, %c0_114] : memref<8x32xf32, #tpu.memory_space<vmem>>, vector<8x32xf32>
      %c0_115 = arith.constant 0 : index
      %c0_116 = arith.constant 0 : index
      %c0_117 = arith.constant 0 : index
      %178 = vector.load %arg6[%c0_115, %c0_116, %c0_117] : memref<1x8x32xf32, #tpu.memory_space<vmem>>, vector<1x8x32xf32>
      %179 = vector.shape_cast %178 : vector<1x8x32xf32> to vector<8x32xf32>
      %180 = vector.shape_cast %177 : vector<8x32xf32> to vector<1x8x32xf32>
      tpu.vector_store %arg6[%c0_115, %c0_116, %c0_117], %180 {strides = array<i32>} : memref<1x8x32xf32, #tpu.memory_space<vmem>>, vector<1x8x32xf32>,
    } else {
    }
    return
  }
  func.func @transform_0(%arg0: i32, %arg1: i32, %arg2: i32) -> (i32, i32, i32) {
    %c0_i32 = arith.constant 0 : i32
    %c0_i32_0 = arith.constant 0 : i32
    return %arg0, %arg1, %c0_i32 : i32, i32, i32
  }
  func.func @transform_1(%arg0: i32, %arg1: i32, %arg2: i32) -> (i32, i32, i32) {
    %c0_i32 = arith.constant 0 : i32
    %c0_i32_0 = arith.constant 0 : i32
    return %arg0, %arg2, %c0_i32 : i32, i32, i32
  }
  func.func @transform_2(%arg0: i32, %arg1: i32, %arg2: i32) -> (i32, i32, i32) {
    %c0_i32 = arith.constant 0 : i32
    %c0_i32_0 = arith.constant 0 : i32
    return %arg0, %arg2, %c0_i32 : i32, i32, i32
  }
  func.func @transform_3(%arg0: i32, %arg1: i32, %arg2: i32) -> (i32, i32, i32) {
    %c0_i32 = arith.constant 0 : i32
    %c0_i32_0 = arith.constant 0 : i32
    return %arg0, %arg1, %c0_i32 : i32, i32, i32
  }
}

</mosaic_0001>

<llo_original>
// kernel: multi_head_attention.9
$region0: #{multi_head_attention.9}
  #allocation0 [shape = 'u32[]', space=smem, size = 0x4, offset = 0x4, fixed_abs, tag = 'smem constant byte address 0x4 - core index']
  #allocation1 [shape = 'u32[144,128]{1,0:T(1,128)}', space=vmem, size = 0x12000, scoped, tag = 'internal scratch']
  %s0 = inlined_call_operand.vmem [shape: f32[16,32], index: 0, kind: input, shape index: {}]
  %s1 = inlined_call_operand.vmem [shape: f32[32,32], index: 1, kind: input, shape index: {}]
  %s2 = inlined_call_operand.vmem [shape: f32[1,32], index: 2, kind: input, shape index: {}]
  %s3 = inlined_call_operand.hbm [shape: f32[16,32], index: 3, kind: output, shape index: {}]
  %s4 = sld [smem:[#allocation0]]
  $region22: #{multi_head_attention.9} parent=0
    _
  %s6 = ssub.s32 1, %s4
  %s7 = scalar_select 0, %s6, %s4
  $region1: #{multi_head_attention.9} parent=0
    #allocation2 [shape = 'u8[8192]{0}', space=vmem, size = 0x2000, scoped, tag = 'output window, operand 0, single buffered']
    #allocation3 [shape = 's32[1]{0}', space=sflag, size = 0x4, scoped, tag = 'scoped memory for multi_head_attention.9']
    %8 = vsyncpa [#allocation3], 0
    // Predicated region
    $region2: #{multi_head_attention.9} parent=1 // pred_check
      _
    $region3: #{multi_head_attention.9} parent=1 // pred_check_branch
      %10 = sbr.rel (0) target = $region5
    $region4: #{multi_head_attention.9} parent=1 // pred_region
      _
    $region5: #{multi_head_attention.9} parent=1 // pred_fallthru
      _
    // Predicated region
    $region6: #{multi_head_attention.9} parent=1 // pred_check
      _
    $region7: #{multi_head_attention.9} parent=1 // pred_check_branch
      %12 = sbr.rel (0) target = $region9
    $region8: #{multi_head_attention.9} parent=1 // pred_region
      _
    $region9: #{multi_head_attention.9} parent=1 // pred_fallthru
      _
    // Predicated region
    $region10: #{multi_head_attention.9} parent=1 // pred_check
      _
    $region11: #{multi_head_attention.9} parent=1 // pred_check_branch
      %14 = sbr.rel (0) target = $region13
    $region12: #{multi_head_attention.9} parent=1 // pred_region
      _
    $region13: #{multi_head_attention.9} parent=1 // pred_fallthru
      _
    %v15 = vld [vmem:[%s0] sm:$0xff]
    %v16 = vld [vmem:[%s0 + $0x8] sm:$0xff]
    %v17 = vld [vmem:[%s1] sm:$0xff]
    %v18 = vld [vmem:[%s1 + $0x8] sm:$0xff]
    %v19 = vld [vmem:[%s1 + $0x10] sm:$0xff]
    %v20 = vld [vmem:[%s1 + $0x18] sm:$0xff]
    %v21 = vld [vmem:[%s2] sm:$0x1]
    %v23 = vlaneseq
    %v24 = vshrl.u32 %v23, 7
    %v25 = vsub.s32 0, %v24
    %v26 = vrot.slane %v21, %v25
    %vm28 = vcmask 261120
    %v30 = vsel %vm28, %v15, 0
    %v33 = vsel %vm28, %v16, 0
    %35 = vmatprep.subr.mxu0 0.0
    %36 = vmatpush1.msra.mxu0 %v17
    %37 = vmatprep.subr.mxu0 0.0
    %38 = vmatpush1.msra.mxu0 %v18
    %39 = vmatprep.subr.mxu0 0.0
    %40 = vmatpush1.msra.mxu0 %v19
    %41 = vmatprep.subr.mxu0 0.0
    %42 = vmatpush1.msra.mxu0 %v20
    %43 = vmatprep.subr.mxu0 0.0
    %44 = vmatpush1.msra.mxu0 0.0
    %45 = vmatprep.subr.mxu0 0.0
    %46 = vmatpush1.msra.mxu0 0.0
    %47 = vmatprep.subr.mxu0 0.0
    %48 = vmatpush1.msra.mxu0 0.0
    %49 = vmatprep.subr.mxu0 0.0
    %50 = vmatpush1.msra.mxu0 0.0
    %51 = vmatprep.subr.mxu0 0.0
    %52 = vmatpush1.msra.mxu0 0.0
    %53 = vmatprep.subr.mxu0 0.0
    %54 = vmatpush1.msra.mxu0 0.0
    %55 = vmatprep.subr.mxu0 0.0
    %56 = vmatpush1.msra.mxu0 0.0
    %57 = vmatprep.subr.mxu0 0.0
    %58 = vmatpush1.msra.mxu0 0.0
    %59 = vmatprep.subr.mxu0 0.0
    %60 = vmatpush1.msra.mxu0 0.0
    %61 = vmatprep.subr.mxu0 0.0
    %62 = vmatpush1.msra.mxu0 0.0
    %63 = vmatprep.subr.mxu0 0.0
    %64 = vmatpush1.msra.mxu0 0.0
    %65 = vmatprep.subr.mxu0 0.0
    %66 = vmatpush1.msra.mxu0 0.0
    %67 = vmatprep.subr.mxu0 0.0
    %68 = vmatpush1.msra.mxu0 0.0
    %69 = vmatprep.subr.mxu0 0.0
    %70 = vmatpush1.msra.mxu0 0.0
    %71 = vmatprep.subr.mxu0 0.0
    %72 = vmatpush1.msra.mxu0 0.0
    %73 = vmatprep.subr.mxu0 0.0
    %74 = vmatpush1.msra.mxu0 0.0
    %75 = vmatprep.subr.mxu0 0.0
    %76 = vmatpush1.msra.mxu0 0.0
    %77 = vmatprep.subr.mxu0 0.0
    %78 = vmatpush1.msra.mxu0 0.0
    %79 = vmatprep.subr.mxu0 0.0
    %80 = vmatpush1.msra.mxu0 0.0
    %81 = vmatprep.subr.mxu0 0.0
    %82 = vmatpush1.msra.mxu0 0.0
    %83 = vmatprep.subr.mxu0 0.0
    %84 = vmatpush1.msra.mxu0 0.0
    %85 = vmatprep.subr.mxu0 0.0
    %86 = vmatpush1.msra.mxu0 0.0
    %87 = vmatprep.subr.mxu0 0.0
    %88 = vmatpush1.msra.mxu0 0.0
    %89 = vmatprep.subr.mxu0 0.0
    %90 = vmatpush1.msra.mxu0 0.0
    %91 = vmatprep.subr.mxu0 0.0
    %92 = vmatpush1.msra.mxu0 0.0
    %93 = vmatprep.subr.mxu0 0.0
    %94 = vmatpush1.msra.mxu0 0.0
    %95 = vmatprep.subr.mxu0 0.0
    %96 = vmatpush1.msra.mxu0 0.0
    %97 = vmatprep.subr.mxu0 0.0
    %98 = vmatpush1.msra.mxu0 0.0
    %99 = vmatprep.mubr.f32.mxu0 0.0
    %100 = vmatmul.mubr.f32.gmra.mrb[0].mxu0 %v30
    %v101 = vpop.f32.mrb[0].mxu0
    %v102 = vadd.f32 %v26, %v101
    %v103 = vpop.f32.mrb[0].mxu0
    %104 = vmatprep.mubr.f32.mxu0 0.0
    %105 = vmatmul.mubr.f32.gmra.mrb[0].mxu0 %v33
    %v106 = vpop.f32.mrb[0].mxu0
    %v107 = vadd.f32 %v26, %v106
    %v108 = vpop.f32.mrb[0].mxu0
    %109 = vdwg.mxu0
    %110 = vst.msk [vmem:[#allocation2] sm:$0xff] %vm28, %v102
    %111 = vst.msk [vmem:[#allocation2 + $0x8] sm:$0xff] %vm28, %v107
    // Predicated region
    $region14: #{multi_head_attention.9} parent=1 // pred_check
      _
    $region15: #{multi_head_attention.9} parent=1 // pred_check_branch
      %113 = sbr.rel (0) target = $region17
    $region16: #{multi_head_attention.9} parent=1 // pred_region
      %s115 = ssub.s32 256, 256
      %116 = vsyncadd [#allocation3], %s115
      %s117 = sshll.u32 [#allocation2], 4
      %s118 = int_to_ptr.vmem [resolvable:$true] %s117
      %123 = dma.vmem_to_hbm [thread:$0]  %s118, 256, %s3, [#allocation3], 128, 128, 8
    $region17: #{multi_head_attention.9} parent=1 // pred_fallthru
      _
    // Predicated region
    $region18: #{multi_head_attention.9} parent=1 // pred_check
      _
    $region19: #{multi_head_attention.9} parent=1 // pred_check_branch
      %125 = sbr.rel (0) target = $region21
    $region20: #{multi_head_attention.9} parent=1 // pred_region
      %126 = dma.done [#allocation3], 256
    $region21: #{multi_head_attention.9} parent=1 // pred_fallthru
      _
    %127 = vsyncpa [#allocation3], 1

// kernel: multi_head_attention.7
$region0: #{multi_head_attention.7}
  #allocation0 [shape = 'u32[]', space=smem, size = 0x4, offset = 0x4, fixed_abs, tag = 'smem constant byte address 0x4 - core index']
  #allocation1 [shape = 'u32[144,128]{1,0:T(1,128)}', space=vmem, size = 0x12000, scoped, tag = 'internal scratch']
  %s0 = inlined_call_operand.vmem [shape: f32[16,32], index: 0, kind: input, shape index: {}]
  %s1 = inlined_call_operand.vmem [shape: f32[32,32], index: 1, kind: input, shape index: {}]
  %s2 = inlined_call_operand.vmem [shape: f32[1,32], index: 2, kind: input, shape index: {}]
  %s3 = inlined_call_operand.vmem [shape: f32[16,32], index: 3, kind: output, shape index: {}]
  %s4 = sld [smem:[#allocation0]]
  $region22: #{multi_head_attention.7} parent=0
    _
  %s6 = ssub.s32 1, %s4
  %s7 = scalar_select 0, %s6, %s4
  // Predicated region
  $region2: #{multi_head_attention.7} parent=0 // pred_check
    _
  $region3: #{multi_head_attention.7} parent=0 // pred_check_branch
    %9 = sbr.rel (0) target = $region5
  $region4: #{multi_head_attention.7} parent=0 // pred_region
    _
  $region5: #{multi_head_attention.7} parent=0 // pred_fallthru
    _
  // Predicated region
  $region6: #{multi_head_attention.7} parent=0 // pred_check
    _
  $region7: #{multi_head_attention.7} parent=0 // pred_check_branch
    %11 = sbr.rel (0) target = $region9
  $region8: #{multi_head_attention.7} parent=0 // pred_region
    _
  $region9: #{multi_head_attention.7} parent=0 // pred_fallthru
    _
  // Predicated region
  $region10: #{multi_head_attention.7} parent=0 // pred_check
    _
  $region11: #{multi_head_attention.7} parent=0 // pred_check_branch
    %13 = sbr.rel (0) target = $region13
  $region12: #{multi_head_attention.7} parent=0 // pred_region
    _
  $region13: #{multi_head_attention.7} parent=0 // pred_fallthru
    _
  %v14 = vld [vmem:[%s0] sm:$0xff]
  %v15 = vld [vmem:[%s0 + $0x8] sm:$0xff]
  %v16 = vld [vmem:[%s1] sm:$0xff]
  %v17 = vld [vmem:[%s1 + $0x8] sm:$0xff]
  %v18 = vld [vmem:[%s1 + $0x10] sm:$0xff]
  %v19 = vld [vmem:[%s1 + $0x18] sm:$0xff]
  %v20 = vld [vmem:[%s2] sm:$0x1]
  %v22 = vlaneseq
  %v23 = vshrl.u32 %v22, 7
  %v24 = vsub.s32 0, %v23
  %v25 = vrot.slane %v20, %v24
  %vm27 = vcmask 261120
  %v29 = vsel %vm27, %v14, 0
  %v32 = vsel %vm27, %v15, 0
  %34 = vmatprep.subr.mxu0 0.0
  %35 = vmatpush1.msra.mxu0 %v16
  %36 = vmatprep.subr.mxu0 0.0
  %37 = vmatpush1.msra.mxu0 %v17
  %38 = vmatprep.subr.mxu0 0.0
  %39 = vmatpush1.msra.mxu0 %v18
  %40 = vmatprep.subr.mxu0 0.0
  %41 = vmatpush1.msra.mxu0 %v19
  %42 = vmatprep.subr.mxu0 0.0
  %43 = vmatpush1.msra.mxu0 0.0
  %44 = vmatprep.subr.mxu0 0.0
  %45 = vmatpush1.msra.mxu0 0.0
  %46 = vmatprep.subr.mxu0 0.0
  %47 = vmatpush1.msra.mxu0 0.0
  %48 = vmatprep.subr.mxu0 0.0
  %49 = vmatpush1.msra.mxu0 0.0
  %50 = vmatprep.subr.mxu0 0.0
  %51 = vmatpush1.msra.mxu0 0.0
  %52 = vmatprep.subr.mxu0 0.0
  %53 = vmatpush1.msra.mxu0 0.0
  %54 = vmatprep.subr.mxu0 0.0
  %55 = vmatpush1.msra.mxu0 0.0
  %56 = vmatprep.subr.mxu0 0.0
  %57 = vmatpush1.msra.mxu0 0.0
  %58 = vmatprep.subr.mxu0 0.0
  %59 = vmatpush1.msra.mxu0 0.0
  %60 = vmatprep.subr.mxu0 0.0
  %61 = vmatpush1.msra.mxu0 0.0
  %62 = vmatprep.subr.mxu0 0.0
  %63 = vmatpush1.msra.mxu0 0.0
  %64 = vmatprep.subr.mxu0 0.0
  %65 = vmatpush1.msra.mxu0 0.0
  %66 = vmatprep.subr.mxu0 0.0
  %67 = vmatpush1.msra.mxu0 0.0
  %68 = vmatprep.subr.mxu0 0.0
  %69 = vmatpush1.msra.mxu0 0.0
  %70 = vmatprep.subr.mxu0 0.0
  %71 = vmatpush1.msra.mxu0 0.0
  %72 = vmatprep.subr.mxu0 0.0
  %73 = vmatpush1.msra.mxu0 0.0
  %74 = vmatprep.subr.mxu0 0.0
  %75 = vmatpush1.msra.mxu0 0.0
  %76 = vmatprep.subr.mxu0 0.0
  %77 = vmatpush1.msra.mxu0 0.0
  %78 = vmatprep.subr.mxu0 0.0
  %79 = vmatpush1.msra.mxu0 0.0
  %80 = vmatprep.subr.mxu0 0.0
  %81 = vmatpush1.msra.mxu0 0.0
  %82 = vmatprep.subr.mxu0 0.0
  %83 = vmatpush1.msra.mxu0 0.0
  %84 = vmatprep.subr.mxu0 0.0
  %85 = vmatpush1.msra.mxu0 0.0
  %86 = vmatprep.subr.mxu0 0.0
  %87 = vmatpush1.msra.mxu0 0.0
  %88 = vmatprep.subr.mxu0 0.0
  %89 = vmatpush1.msra.mxu0 0.0
  %90 = vmatprep.subr.mxu0 0.0
  %91 = vmatpush1.msra.mxu0 0.0
  %92 = vmatprep.subr.mxu0 0.0
  %93 = vmatpush1.msra.mxu0 0.0
  %94 = vmatprep.subr.mxu0 0.0
  %95 = vmatpush1.msra.mxu0 0.0
  %96 = vmatprep.subr.mxu0 0.0
  %97 = vmatpush1.msra.mxu0 0.0
  %98 = vmatprep.mubr.f32.mxu0 0.0
  %99 = vmatmul.mubr.f32.gmra.mrb[0].mxu0 %v29
  %v100 = vpop.f32.mrb[0].mxu0
  %v101 = vadd.f32 %v25, %v100
  %v102 = vpop.f32.mrb[0].mxu0
  %103 = vmatprep.mubr.f32.mxu0 0.0
  %104 = vmatmul.mubr.f32.gmra.mrb[0].mxu0 %v32
  %v105 = vpop.f32.mrb[0].mxu0
  %v106 = vadd.f32 %v25, %v105
  %v107 = vpop.f32.mrb[0].mxu0
  %108 = vdwg.mxu0
  %109 = vst.msk [vmem:[%s3] sm:$0xff] %vm27, %v101
  %110 = vst.msk [vmem:[%s3 + $0x8] sm:$0xff] %vm27, %v106
  // Predicated region
  $region14: #{multi_head_attention.7} parent=0 // pred_check
    _
  $region15: #{multi_head_attention.7} parent=0 // pred_check_branch
    %112 = sbr.rel (0) target = $region17
  $region16: #{multi_head_attention.7} parent=0 // pred_region
    _
  $region17: #{multi_head_attention.7} parent=0 // pred_fallthru
    _
  // Predicated region
  $region18: #{multi_head_attention.7} parent=0 // pred_check
    _
  $region19: #{multi_head_attention.7} parent=0 // pred_check_branch
    %114 = sbr.rel (0) target = $region21
  $region20: #{multi_head_attention.7} parent=0 // pred_region
    _
  $region21: #{multi_head_attention.7} parent=0 // pred_fallthru
    _

// kernel: multi_head_attention.8
$region0: #{multi_head_attention.8}
  #allocation0 [shape = 'u32[]', space=smem, size = 0x4, offset = 0x4, fixed_abs, tag = 'smem constant byte address 0x4 - core index']
  #allocation1 [shape = 'u32[144,128]{1,0:T(1,128)}', space=vmem, size = 0x12000, scoped, tag = 'internal scratch']
  #allocation2 [shape = 'f32[4,8,1]{2,1,0:T(8,128)}', space=vmem, size = 0x4000, scoped, tag = 'scratch operand']
  #allocation3 [shape = 'f32[4,8,1]{2,1,0:T(8,128)}', space=vmem, size = 0x4000, scoped, tag = 'scratch operand']
  #allocation4 [shape = 'f32[8,32]{1,0:T(8,128)}', space=vmem, size = 0x1000, scoped, tag = 'scratch operand']
  %s0 = inlined_call_operand.vmem [shape: f32[2,8,32], index: 0, kind: input, shape index: {}]
  %s1 = inlined_call_operand.vmem [shape: f32[2,8,32], index: 1, kind: input, shape index: {}]
  %s2 = inlined_call_operand.vmem [shape: f32[2,8,32], index: 2, kind: input, shape index: {}]
  %s3 = inlined_call_operand.vmem [shape: f32[2,8,32], index: 3, kind: output, shape index: {}]
  %s4 = sld [smem:[#allocation0]]
  $region53: #{multi_head_attention.8} parent=0
    _
  %s6 = ssub.s32 1, %s4
  %s7 = scalar_select 0, %s6, %s4
  loop: start=0, step=1, limit=4
  $region2: #{multi_head_attention.8} parent=0 // loop_pre_header
    _
  $region3: #{multi_head_attention.8} parent=0 // loop_header
    %s9 = sphi 0, %s13
    %p10 = scmp.ge.s32.totalorder %s9, 4
    %s16 = sphi 0, %s35
    %s17 = sphi 0, %s31
    %s18 = sphi 0, %s27
    %s19 = sphi 0, %s16
    %s20 = sphi 0, %s17
    %s21 = sphi 0, %s18
    %s22 = sphi 0, %s19
    %s23 = sphi 0, %s20
    %s24 = sphi 0, %s21
    %s40 = sphi 0, %s42
    %s43 = sphi 0, %s40
    %s44 = sphi 0, %s43
    %s60 = sphi 0, %s44
    %s68 = sphi 0, %s70
    %s71 = sphi 0, %s68
    %s72 = sphi 0, %s71
    %s88 = sphi 0, %s72
    %s96 = sphi 0, %s98
    %s99 = sphi 0, %s96
    %s100 = sphi 0, %s99
    %s116 = sphi 0, %s100
    %s124 = sphi 0, %s126
    %s127 = sphi 0, %s124
    %s128 = sphi 0, %s127
    %s144 = sphi 0, %s128
  $region4: #{multi_head_attention.8} parent=0 // loop_header_branch
    %12 = sbr.rel (%p10) target = $region8
  $region5: #{multi_head_attention.8} parent=0 // loop_body
    %s14 = ssub.s32 %s9, 1
    %s15 = ssub.s32 %s9, 2
    %s25 = sadd.s32 1, %s18
    %p26 = scmp.ge.s32.totalorder %s25, 1
    %s27 = scalar_select %p26, 0, %s25
    %s28 = sadd.s32 1, %s17
    %s29 = scalar_select %p26, %s28, %s17
    %p30 = scmp.ge.s32.totalorder %s29, 1
    %s31 = scalar_select %p30, 0, %s29
    %s32 = sadd.s32 1, %s16
    %s33 = scalar_select %p30, %s32, %s16
    %p34 = scmp.ge.s32.totalorder %s33, 2
    %s35 = scalar_select %p34, 0, %s33
    %s36 = ssub.s32 %s16, %s35
    %s37 = ssub.s32 %s17, %s31
    %s38 = sor.u32 %s36, %s37
    %p39 = scmp.eq.s32.totalorder %s38, 0
    %s41 = sadd.s32 %s40, 1
    %s42 = scalar_select %p39, %s40, %s41
    %p45 = pneg %p39
    %p46 = scmp.eq.s32.totalorder %s9, 1
    %p47 = por %p45, %p46
    %p48 = scmp.ne.s32.totalorder %s40, %s43
    %p49 = scmp.eq.s32.totalorder %s9, 0
    %p50 = por %p48, %p49
    %p51 = scmp.ne.s32.totalorder %s40, %s43
    %p52 = scmp.eq.s32.totalorder %s14, 1
    %p53 = por %p51, %p52
    %p54 = scmp.ne.s32.totalorder %s43, %s44
    %p55 = scmp.eq.s32.totalorder %s14, 0
    %p56 = por %p54, %p55
    %p57 = scmp.ne.s32.totalorder %s43, %s44
    %p58 = scmp.eq.s32.totalorder %s15, 1
    %p59 = por %p57, %p58
    %p61 = scmp.ne.s32.totalorder %s44, %s60
    %p62 = scmp.eq.s32.totalorder %s15, 0
    %p63 = por %p61, %p62
    %s64 = ssub.s32 %s16, %s35
    %s65 = ssub.s32 %s18, %s27
    %s66 = sor.u32 %s64, %s65
    %p67 = scmp.eq.s32.totalorder %s66, 0
    %s69 = sadd.s32 %s68, 1
    %s70 = scalar_select %p67, %s68, %s69
    %p73 = pneg %p67
    %p74 = scmp.eq.s32.totalorder %s9, 1
    %p75 = por %p73, %p74
    %p76 = scmp.ne.s32.totalorder %s68, %s71
    %p77 = scmp.eq.s32.totalorder %s9, 0
    %p78 = por %p76, %p77
    %p79 = scmp.ne.s32.totalorder %s68, %s71
    %p80 = scmp.eq.s32.totalorder %s14, 1
    %p81 = por %p79, %p80
    %p82 = scmp.ne.s32.totalorder %s71, %s72
    %p83 = scmp.eq.s32.totalorder %s14, 0
    %p84 = por %p82, %p83
    %p85 = scmp.ne.s32.totalorder %s71, %s72
    %p86 = scmp.eq.s32.totalorder %s15, 1
    %p87 = por %p85, %p86
    %p89 = scmp.ne.s32.totalorder %s72, %s88
    %p90 = scmp.eq.s32.totalorder %s15, 0
    %p91 = por %p89, %p90
    %s92 = ssub.s32 %s16, %s35
    %s93 = ssub.s32 %s18, %s27
    %s94 = sor.u32 %s92, %s93
    %p95 = scmp.eq.s32.totalorder %s94, 0
    %s97 = sadd.s32 %s96, 1
    %s98 = scalar_select %p95, %s96, %s97
    %p101 = pneg %p95
    %p102 = scmp.eq.s32.totalorder %s9, 1
    %p103 = por %p101, %p102
    %p104 = scmp.ne.s32.totalorder %s96, %s99
    %p105 = scmp.eq.s32.totalorder %s9, 0
    %p106 = por %p104, %p105
    %p107 = scmp.ne.s32.totalorder %s96, %s99
    %p108 = scmp.eq.s32.totalorder %s14, 1
    %p109 = por %p107, %p108
    %p110 = scmp.ne.s32.totalorder %s99, %s100
    %p111 = scmp.eq.s32.totalorder %s14, 0
    %p112 = por %p110, %p111
    %p113 = scmp.ne.s32.totalorder %s99, %s100
    %p114 = scmp.eq.s32.totalorder %s15, 1
    %p115 = por %p113, %p114
    %p117 = scmp.ne.s32.totalorder %s100, %s116
    %p118 = scmp.eq.s32.totalorder %s15, 0
    %p119 = por %p117, %p118
    %s120 = ssub.s32 %s16, %s35
    %s121 = ssub.s32 %s17, %s31
    %s122 = sor.u32 %s120, %s121
    %p123 = scmp.eq.s32.totalorder %s122, 0
    %s125 = sadd.s32 %s124, 1
    %s126 = scalar_select %p123, %s124, %s125
    %p129 = pneg %p123
    %p130 = scmp.eq.s32.totalorder %s9, 1
    %p131 = por %p129, %p130
    %p132 = scmp.ne.s32.totalorder %s124, %s127
    %p133 = scmp.eq.s32.totalorder %s9, 0
    %p134 = por %p132, %p133
    %p135 = scmp.ne.s32.totalorder %s124, %s127
    %p136 = scmp.eq.s32.totalorder %s14, 1
    %p137 = por %p135, %p136
    %p138 = scmp.ne.s32.totalorder %s127, %s128
    %p139 = scmp.eq.s32.totalorder %s14, 0
    %p140 = por %p138, %p139
    %p141 = scmp.ne.s32.totalorder %s127, %s128
    %p142 = scmp.eq.s32.totalorder %s15, 1
    %p143 = por %p141, %p142
    %p145 = scmp.ne.s32.totalorder %s128, %s144
    %p146 = scmp.eq.s32.totalorder %s15, 0
    %p147 = por %p145, %p146
    %p148 = scmp.le.s32.totalorder 1, %s9
    %p149 = scmp.lt.s32.totalorder %s9, 3
    %p150 = pnand %p148, %p149
    %p151 = pneg %p150
    // Predicated region
    $region9: #{multi_head_attention.8} parent=5 // pred_check
      _
    $region10: #{multi_head_attention.8} parent=5 // pred_check_branch
      %153 = sbr.rel (%p150) target = $region12
    $region11: #{multi_head_attention.8} parent=5 // pred_region
      %s154 = ssub.s32 %s9, 1
    $region12: #{multi_head_attention.8} parent=5 // pred_fallthru
      _
    %p155 = scmp.lt.s32.totalorder %s9, 2
    // Predicated region
    $region13: #{multi_head_attention.8} parent=5 // pred_check
      %p156 = pneg %p155
    $region14: #{multi_head_attention.8} parent=5 // pred_check_branch
      %158 = sbr.rel (%p156) target = $region16
    $region15: #{multi_head_attention.8} parent=5 // pred_region
      // Predicated region
      $region17: #{multi_head_attention.8} parent=15 // pred_check
        %p159 = pneg %p50
      $region18: #{multi_head_attention.8} parent=15 // pred_check_branch
        %161 = sbr.rel (%p159) target = $region20
      $region19: #{multi_head_attention.8} parent=15 // pred_region
        %p162 = scmp.lt.s32.totalorder %s16, 1
        %s163 = scalar_select %p162, %s16, 1
        %p164 = scmp.lt.s32.totalorder %s17, 0
        %s165 = scalar_select %p164, %s17, 0
        %s166 = sadd.s32 %s165, %s163
        %s167 = smul.addr %s166, 8
        %s168 = scalar_lea.vmem %s0, %s167
      $region20: #{multi_head_attention.8} parent=15 // pred_fallthru
        _
      // Predicated region
      $region21: #{multi_head_attention.8} parent=15 // pred_check
        %p169 = pneg %p78
      $region22: #{multi_head_attention.8} parent=15 // pred_check_branch
        %171 = sbr.rel (%p169) target = $region24
      $region23: #{multi_head_attention.8} parent=15 // pred_region
        %p172 = scmp.lt.s32.totalorder %s16, 1
        %s173 = scalar_select %p172, %s16, 1
        %p174 = scmp.lt.s32.totalorder %s18, 0
        %s175 = scalar_select %p174, %s18, 0
        %s176 = sadd.s32 %s175, %s173
        %s177 = smul.addr %s176, 8
        %s178 = scalar_lea.vmem %s1, %s177
      $region24: #{multi_head_attention.8} parent=15 // pred_fallthru
        _
      // Predicated region
      $region25: #{multi_head_attention.8} parent=15 // pred_check
        %p179 = pneg %p106
      $region26: #{multi_head_attention.8} parent=15 // pred_check_branch
        %181 = sbr.rel (%p179) target = $region28
      $region27: #{multi_head_attention.8} parent=15 // pred_region
        %p182 = scmp.lt.s32.totalorder %s16, 1
        %s183 = scalar_select %p182, %s16, 1
        %p184 = scmp.lt.s32.totalorder %s18, 0
        %s185 = scalar_select %p184, %s18, 0
        %s186 = sadd.s32 %s185, %s183
        %s187 = smul.addr %s186, 8
        %s188 = scalar_lea.vmem %s2, %s187
      $region28: #{multi_head_attention.8} parent=15 // pred_fallthru
        _
    $region16: #{multi_head_attention.8} parent=5 // pred_fallthru
      _
    %p189 = scmp.le.s32.totalorder 1, %s9
    %p190 = scmp.lt.s32.totalorder %s9, 3
    %p191 = pnand %p189, %p190
    %p192 = pneg %p191
    // Predicated region
    $region29: #{multi_head_attention.8} parent=5 // pred_check
      _
    $region30: #{multi_head_attention.8} parent=5 // pred_check_branch
      %194 = sbr.rel (%p191) target = $region32
    $region31: #{multi_head_attention.8} parent=5 // pred_region
      %s195 = ssub.s32 %s9, 1
      %p196 = scmp.lt.s32.totalorder %s19, 1
      %s197 = scalar_select %p196, %s19, 1
      %p198 = scmp.lt.s32.totalorder %s20, 0
      %s199 = scalar_select %p198, %s20, 0
      %s200 = sadd.s32 %s199, %s197
      %s201 = smul.addr %s200, 8
      %s202 = scalar_lea.vmem %s0, %s201
      %p203 = pneg %p56
      %p204 = pneg %p53
      %p205 = scmp.lt.s32.totalorder %s19, 1
      %s206 = scalar_select %p205, %s19, 1
      %p207 = scmp.lt.s32.totalorder %s21, 0
      %s208 = scalar_select %p207, %s21, 0
      %s209 = sadd.s32 %s208, %s206
      %s210 = smul.addr %s209, 8
      %s211 = scalar_lea.vmem %s1, %s210
      %p212 = pneg %p84
      %p213 = pneg %p81
      %p214 = scmp.lt.s32.totalorder %s19, 1
      %s215 = scalar_select %p214, %s19, 1
      %p216 = scmp.lt.s32.totalorder %s21, 0
      %s217 = scalar_select %p216, %s21, 0
      %s218 = sadd.s32 %s217, %s215
      %s219 = smul.addr %s218, 8
      %s220 = scalar_lea.vmem %s2, %s219
      %p221 = pneg %p112
      %p222 = pneg %p109
      %p223 = pneg %p140
      %p224 = pneg %p137
      %p225 = scmp.lt.s32.totalorder %s19, 1
      %s226 = scalar_select %p225, %s19, 1
      %p227 = scmp.lt.s32.totalorder %s20, 0
      %s228 = scalar_select %p227, %s20, 0
      %s229 = sadd.s32 %s228, %s226
      %s230 = smul.addr %s229, 8
      %s231 = scalar_lea.vmem %s3, %s230
      %p232 = scmp.lt.s32.totalorder %s19, 1
      %s233 = scalar_select %p232, %s19, 1
      %p234 = scmp.lt.s32.totalorder %s20, 0
      %s235 = scalar_select %p234, %s20, 0
      %s236 = sadd.s32 %s235, %s233
      %s237 = smul.addr %s236, 8
      %s238 = scalar_lea.vmem %s0, %s237
      %p239 = scmp.lt.s32.totalorder %s19, 1
      %s240 = scalar_select %p239, %s19, 1
      %p241 = scmp.lt.s32.totalorder %s21, 0
      %s242 = scalar_select %p241, %s21, 0
      %s243 = sadd.s32 %s242, %s240
      %s244 = smul.addr %s243, 8
      %s245 = scalar_lea.vmem %s1, %s244
      %p246 = scmp.lt.s32.totalorder %s19, 1
      %s247 = scalar_select %p246, %s19, 1
      %p248 = scmp.lt.s32.totalorder %s21, 0
      %s249 = scalar_select %p248, %s21, 0
      %s250 = sadd.s32 %s249, %s247
      %s251 = smul.addr %s250, 8
      %s252 = scalar_lea.vmem %s2, %s251
      %p253 = scmp.lt.s32.totalorder %s19, 1
      %s254 = scalar_select %p253, %s19, 1
      %p255 = scmp.lt.s32.totalorder %s20, 0
      %s256 = scalar_select %p255, %s20, 0
      %s257 = sadd.s32 %s256, %s254
      %s258 = smul.addr %s257, 8
      %s259 = scalar_lea.vmem %s3, %s258
      %p261 = scmp.eq.s32.totalorder %s21, 0
      // Predicated region
      $region33: #{multi_head_attention.8} parent=31 // pred_check
        %p262 = pneg %p261
      $region34: #{multi_head_attention.8} parent=31 // pred_check_branch
        %264 = sbr.rel (%p262) target = $region36
      $region35: #{multi_head_attention.8} parent=31 // pred_region
        %vm265 = vcmask 7168
        %266 = vst.msk [vmem:[#allocation2] sm:$0xff] %vm265, -inf
        %267 = vst.msk [vmem:[#allocation2 + $0x8] sm:$0xff] %vm265, -inf
        %268 = vst.msk [vmem:[#allocation2 + $0x10] sm:$0xff] %vm265, -inf
        %269 = vst.msk [vmem:[#allocation2 + $0x18] sm:$0xff] %vm265, -inf
        %270 = vst.msk [vmem:[#allocation3] sm:$0xff] %vm265, 0.0
        %271 = vst.msk [vmem:[#allocation3 + $0x8] sm:$0xff] %vm265, 0.0
        %272 = vst.msk [vmem:[#allocation3 + $0x10] sm:$0xff] %vm265, 0.0
        %273 = vst.msk [vmem:[#allocation3 + $0x18] sm:$0xff] %vm265, 0.0
        %vm274 = vcmask 261120
        %275 = vst.msk [vmem:[#allocation4] sm:$0xff] %vm274, 0.0
      $region36: #{multi_head_attention.8} parent=31 // pred_fallthru
        _
      %v276 = vld [vmem:[%s238] sm:$0xff]
      %v277 = vmul.f32 %v276, 0.35355338
      %v278 = vpack.c.bf16 %v277, %v277
      %v279 = vld [vmem:[%s245] sm:$0xff]
      %v280 = vpack.c.bf16 %v279, %v279
      %v281 = vld [vmem:[%s252] sm:$0xff]
      %v282 = vpack.c.bf16 %v281, %v281
      %vm283 = vcmask 64512
      %v285 = vsel %vm283, %v278, 0
      %v288 = vsel %vm283, %v280, 0
      %290 = vmatprep.subr.bf16.mxu0 0
      %291 = vmatpush1.bf16.xpose.msra.mxu0 %v288
      %292 = vmatprep.subr.bf16.mxu0 0
      %293 = vmatpush1.bf16.xpose.msra.mxu0 0
      %294 = vmatprep.subr.bf16.mxu0 0
      %295 = vmatpush1.bf16.xpose.msra.mxu0 0
      %296 = vmatprep.subr.bf16.mxu0 0
      %297 = vmatpush1.bf16.xpose.msra.mxu0 0
      %298 = vmatprep.subr.bf16.mxu0 0
      %299 = vmatpush1.bf16.xpose.msra.mxu0 0
      %300 = vmatprep.subr.bf16.mxu0 0
      %301 = vmatpush1.bf16.xpose.msra.mxu0 0
      %302 = vmatprep.subr.bf16.mxu0 0
      %303 = vmatpush1.bf16.xpose.msra.mxu0 0
      %304 = vmatprep.subr.bf16.mxu0 0
      %305 = vmatpush1.bf16.xpose.msra.mxu0 0
      %306 = vmatprep.subr.bf16.mxu0 0
      %307 = vmatpush1.bf16.xpose.msra.mxu0 0
      %308 = vmatprep.subr.bf16.mxu0 0
      %309 = vmatpush1.bf16.xpose.msra.mxu0 0
      %310 = vmatprep.subr.bf16.mxu0 0
      %311 = vmatpush1.bf16.xpose.msra.mxu0 0
      %312 = vmatprep.subr.bf16.mxu0 0
      %313 = vmatpush1.bf16.xpose.msra.mxu0 0
      %314 = vmatprep.subr.bf16.mxu0 0
      %315 = vmatpush1.bf16.xpose.msra.mxu0 0
      %316 = vmatprep.subr.bf16.mxu0 0
      %317 = vmatpush1.bf16.xpose.msra.mxu0 0
      %318 = vmatprep.subr.bf16.mxu0 0
      %319 = vmatpush1.bf16.xpose.msra.mxu0 0
      %320 = vmatprep.subr.bf16.mxu0 0
      %321 = vmatpush1.bf16.xpose.msra.mxu0 0
      %322 = vmatprep.mubr.bf16.mxu0 0
      %323 = vmatmul.mubr.bf16.gmra.mrb[0].mxu0 %v285
      %v324 = vpop.f32.mrb[0].mxu0
      %v325 = vadd.f32 0.0, %v324
      %v326 = vpop.f32.mrb[0].mxu0
      %v327 = vpop.f32.mrb[0].mxu0
      %v328 = vpop.f32.mrb[0].mxu0
      %329 = vdwg.mxu0
      %v330 = vld [vmem:[#allocation2] sm:$0xff]
      %v331 = vsel %vm283, %v325, -inf
      %332 = vmax.xlane.f32.xlu0 %v331
      %v333 = vpop.xlane.xlu0 %332
      %v334 = vmax.f32 %v330, %v333
      %v335 = vsub.f32 %v330, %v334
      %v336 = vmul.f32 %v335, 1.442695
      %v337 = vpow.pop %v336
      %339 = vset.pattern.permute.xlu0 0
      %340 = vperm.xlu0 %339, %v334
      %v341 = vpop.permute.xlu0 %340
      %v343 = vsub.f32 %v325, %v341
      %v344 = vmul.f32 %v343, 1.442695
      %v345 = vpow.pop %v344
      %v346 = vld [vmem:[#allocation3] sm:$0xff]
      %v347 = vmul.f32 %v337, %v346
      %v348 = vsel %vm283, %v345, 0.0
      %349 = vadd.xlane.f32.xlu0 %v348
      %v350 = vpop.xlane.xlu0 %349
      %v351 = vadd.f32 %v347, %v350
      %vm352 = vcmask 7168
      %353 = vst.msk [vmem:[#allocation3] sm:$0xff] %vm352, %v351
      %v354 = vpack.c.bf16 %v345, %v345
      %v356 = vsel %vm283, %v354, 0
      %vm358 = vcmask 1043456
      %v360 = vsel %vm358, %v282, 0
      %362 = vmatprep.subr.bf16.mxu0 0
      %363 = vmatpush1.bf16.msra.mxu0 %v360
      %364 = vmatprep.subr.bf16.mxu0 0
      %365 = vmatpush1.bf16.msra.mxu0 0
      %366 = vmatprep.subr.bf16.mxu0 0
      %367 = vmatpush1.bf16.msra.mxu0 0
      %368 = vmatprep.subr.bf16.mxu0 0
      %369 = vmatpush1.bf16.msra.mxu0 0
      %370 = vmatprep.subr.bf16.mxu0 0
      %371 = vmatpush1.bf16.msra.mxu0 0
      %372 = vmatprep.subr.bf16.mxu0 0
      %373 = vmatpush1.bf16.msra.mxu0 0
      %374 = vmatprep.subr.bf16.mxu0 0
      %375 = vmatpush1.bf16.msra.mxu0 0
      %376 = vmatprep.subr.bf16.mxu0 0
      %377 = vmatpush1.bf16.msra.mxu0 0
      %378 = vmatprep.subr.bf16.mxu0 0
      %379 = vmatpush1.bf16.msra.mxu0 0
      %380 = vmatprep.subr.bf16.mxu0 0
      %381 = vmatpush1.bf16.msra.mxu0 0
      %382 = vmatprep.subr.bf16.mxu0 0
      %383 = vmatpush1.bf16.msra.mxu0 0
      %384 = vmatprep.subr.bf16.mxu0 0
      %385 = vmatpush1.bf16.msra.mxu0 0
      %386 = vmatprep.subr.bf16.mxu0 0
      %387 = vmatpush1.bf16.msra.mxu0 0
      %388 = vmatprep.subr.bf16.mxu0 0
      %389 = vmatpush1.bf16.msra.mxu0 0
      %390 = vmatprep.subr.bf16.mxu0 0
      %391 = vmatpush1.bf16.msra.mxu0 0
      %392 = vmatprep.subr.bf16.mxu0 0
      %393 = vmatpush1.bf16.msra.mxu0 0
      %394 = vmatprep.mubr.bf16.mxu0 0
      %395 = vmatmul.mubr.bf16.gmra.mrb[0].mxu0 %v356
      %v396 = vpop.f32.mrb[0].mxu0
      %v397 = vadd.f32 0.0, %v396
      %v398 = vpop.f32.mrb[0].mxu0
      %v399 = vpop.f32.mrb[0].mxu0
      %v400 = vpop.f32.mrb[0].mxu0
      %401 = vdwg.mxu0
      %v402 = vld [vmem:[#allocation4] sm:$0xff]
      %404 = vset.pattern.permute.xlu0 0
      %405 = vperm.xlu0 %404, %v337
      %v406 = vpop.permute.xlu0 %405
      %v408 = vmul.f32 %v406, %v402
      %v409 = vadd.f32 %v408, %v397
      %410 = vst.msk [vmem:[#allocation4] sm:$0xff] %vm283, %v409
      %411 = vst.msk [vmem:[#allocation2] sm:$0xff] %vm352, %v334
      %413 = vrot.lane.b32.xlu0 %v278, 120
      %v414 = vpop.permute.xlu0 %413
      %416 = vrot.lane.b32.xlu0 %v280, 120
      %v417 = vpop.permute.xlu0 %416
      %v419 = vsel %vm283, %v414, 0
      %v422 = vsel %vm283, %v417, 0
      %424 = vmatprep.subr.bf16.mxu0 0
      %425 = vmatpush1.bf16.xpose.msra.mxu0 %v422
      %426 = vmatprep.subr.bf16.mxu0 0
      %427 = vmatpush1.bf16.xpose.msra.mxu0 0
      %428 = vmatprep.subr.bf16.mxu0 0
      %429 = vmatpush1.bf16.xpose.msra.mxu0 0
      %430 = vmatprep.subr.bf16.mxu0 0
      %431 = vmatpush1.bf16.xpose.msra.mxu0 0
      %432 = vmatprep.subr.bf16.mxu0 0
      %433 = vmatpush1.bf16.xpose.msra.mxu0 0
      %434 = vmatprep.subr.bf16.mxu0 0
      %435 = vmatpush1.bf16.xpose.msra.mxu0 0
      %436 = vmatprep.subr.bf16.mxu0 0
      %437 = vmatpush1.bf16.xpose.msra.mxu0 0
      %438 = vmatprep.subr.bf16.mxu0 0
      %439 = vmatpush1.bf16.xpose.msra.mxu0 0
      %440 = vmatprep.subr.bf16.mxu0 0
      %441 = vmatpush1.bf16.xpose.msra.mxu0 0
      %442 = vmatprep.subr.bf16.mxu0 0
      %443 = vmatpush1.bf16.xpose.msra.mxu0 0
      %444 = vmatprep.subr.bf16.mxu0 0
      %445 = vmatpush1.bf16.xpose.msra.mxu0 0
      %446 = vmatprep.subr.bf16.mxu0 0
      %447 = vmatpush1.bf16.xpose.msra.mxu0 0
      %448 = vmatprep.subr.bf16.mxu0 0
      %449 = vmatpush1.bf16.xpose.msra.mxu0 0
      %450 = vmatprep.subr.bf16.mxu0 0
      %451 = vmatpush1.bf16.xpose.msra.mxu0 0
      %452 = vmatprep.subr.bf16.mxu0 0
      %453 = vmatpush1.bf16.xpose.msra.mxu0 0
      %454 = vmatprep.subr.bf16.mxu0 0
      %455 = vmatpush1.bf16.xpose.msra.mxu0 0
      %456 = vmatprep.mubr.bf16.mxu0 0
      %457 = vmatmul.mubr.bf16.gmra.mrb[0].mxu0 %v419
      %v458 = vpop.f32.mrb[0].mxu0
      %v459 = vadd.f32 0.0, %v458
      %v460 = vpop.f32.mrb[0].mxu0
      %v461 = vpop.f32.mrb[0].mxu0
      %v462 = vpop.f32.mrb[0].mxu0
      %463 = vdwg.mxu0
      %s464 = scalar_lea.vmem [#allocation2], 8
      %v465 = vld [vmem:[%s464] sm:$0xff]
      %v466 = vsel %vm283, %v459, -inf
      %467 = vmax.xlane.f32.xlu0 %v466
      %v468 = vpop.xlane.xlu0 %467
      %v469 = vmax.f32 %v465, %v468
      %v470 = vsub.f32 %v465, %v469
      %v471 = vmul.f32 %v470, 1.442695
      %v472 = vpow.pop %v471
      %474 = vset.pattern.permute.xlu0 0
      %475 = vperm.xlu0 %474, %v469
      %v476 = vpop.permute.xlu0 %475
      %v478 = vsub.f32 %v459, %v476
      %v479 = vmul.f32 %v478, 1.442695
      %v480 = vpow.pop %v479
      %s481 = scalar_lea.vmem [#allocation3], 8
      %v482 = vld [vmem:[%s481] sm:$0xff]
      %v483 = vmul.f32 %v472, %v482
      %v484 = vsel %vm283, %v480, 0.0
      %485 = vadd.xlane.f32.xlu0 %v484
      %v486 = vpop.xlane.xlu0 %485
      %v487 = vadd.f32 %v483, %v486
      %488 = vst.msk [vmem:[%s481] sm:$0xff] %vm352, %v487
      %v489 = vpack.c.bf16 %v480, %v480
      %491 = vrot.lane.b32.xlu0 %v282, 120
      %v492 = vpop.permute.xlu0 %491
      %v494 = vsel %vm283, %v489, 0
      %v497 = vsel %vm358, %v492, 0
      %499 = vmatprep.subr.bf16.mxu0 0
      %500 = vmatpush1.bf16.msra.mxu0 %v497
      %501 = vmatprep.subr.bf16.mxu0 0
      %502 = vmatpush1.bf16.msra.mxu0 0
      %503 = vmatprep.subr.bf16.mxu0 0
      %504 = vmatpush1.bf16.msra.mxu0 0
      %505 = vmatprep.subr.bf16.mxu0 0
      %506 = vmatpush1.bf16.msra.mxu0 0
      %507 = vmatprep.subr.bf16.mxu0 0
      %508 = vmatpush1.bf16.msra.mxu0 0
      %509 = vmatprep.subr.bf16.mxu0 0
      %510 = vmatpush1.bf16.msra.mxu0 0
      %511 = vmatprep.subr.bf16.mxu0 0
      %512 = vmatpush1.bf16.msra.mxu0 0
      %513 = vmatprep.subr.bf16.mxu0 0
      %514 = vmatpush1.bf16.msra.mxu0 0
      %515 = vmatprep.subr.bf16.mxu0 0
      %516 = vmatpush1.bf16.msra.mxu0 0
      %517 = vmatprep.subr.bf16.mxu0 0
      %518 = vmatpush1.bf16.msra.mxu0 0
      %519 = vmatprep.subr.bf16.mxu0 0
      %520 = vmatpush1.bf16.msra.mxu0 0
      %521 = vmatprep.subr.bf16.mxu0 0
      %522 = vmatpush1.bf16.msra.mxu0 0
      %523 = vmatprep.subr.bf16.mxu0 0
      %524 = vmatpush1.bf16.msra.mxu0 0
      %525 = vmatprep.subr.bf16.mxu0 0
      %526 = vmatpush1.bf16.msra.mxu0 0
      %527 = vmatprep.subr.bf16.mxu0 0
      %528 = vmatpush1.bf16.msra.mxu0 0
      %529 = vmatprep.subr.bf16.mxu0 0
      %530 = vmatpush1.bf16.msra.mxu0 0
      %531 = vmatprep.mubr.bf16.mxu0 0
      %532 = vmatmul.mubr.bf16.gmra.mrb[0].mxu0 %v494
      %v533 = vpop.f32.mrb[0].mxu0
      %v534 = vadd.f32 0.0, %v533
      %v535 = vpop.f32.mrb[0].mxu0
      %v536 = vpop.f32.mrb[0].mxu0
      %v537 = vpop.f32.mrb[0].mxu0
      %538 = vdwg.mxu0
      %v539 = vld [vmem:[#allocation4] sm:$0xff]
      %541 = vset.pattern.permute.xlu0 0
      %542 = vperm.xlu0 %541, %v472
      %v543 = vpop.permute.xlu0 %542
      %v545 = vmul.f32 %v543, %v539
      %547 = vrot.lane.b32.xlu0 %v534, 8
      %v548 = vpop.permute.xlu0 %547
      %v550 = vadd.f32 %v545, %v548
      %vm551 = vcmask 130112
      %552 = vst.msk [vmem:[#allocation4] sm:$0xff] %vm551, %v550
      %553 = vst.msk [vmem:[%s464] sm:$0xff] %vm352, %v469
      %554 = vrot.lane.b32.xlu0 %v278, 112
      %v555 = vpop.permute.xlu0 %554
      %556 = vrot.lane.b32.xlu0 %v280, 112
      %v557 = vpop.permute.xlu0 %556
      %v559 = vsel %vm283, %v555, 0
      %v562 = vsel %vm283, %v557, 0
      %564 = vmatprep.subr.bf16.mxu0 0
      %565 = vmatpush1.bf16.xpose.msra.mxu0 %v562
      %566 = vmatprep.subr.bf16.mxu0 0
      %567 = vmatpush1.bf16.xpose.msra.mxu0 0
      %568 = vmatprep.subr.bf16.mxu0 0
      %569 = vmatpush1.bf16.xpose.msra.mxu0 0
      %570 = vmatprep.subr.bf16.mxu0 0
      %571 = vmatpush1.bf16.xpose.msra.mxu0 0
      %572 = vmatprep.subr.bf16.mxu0 0
      %573 = vmatpush1.bf16.xpose.msra.mxu0 0
      %574 = vmatprep.subr.bf16.mxu0 0
      %575 = vmatpush1.bf16.xpose.msra.mxu0 0
      %576 = vmatprep.subr.bf16.mxu0 0
      %577 = vmatpush1.bf16.xpose.msra.mxu0 0
      %578 = vmatprep.subr.bf16.mxu0 0
      %579 = vmatpush1.bf16.xpose.msra.mxu0 0
      %580 = vmatprep.subr.bf16.mxu0 0
      %581 = vmatpush1.bf16.xpose.msra.mxu0 0
      %582 = vmatprep.subr.bf16.mxu0 0
      %583 = vmatpush1.bf16.xpose.msra.mxu0 0
      %584 = vmatprep.subr.bf16.mxu0 0
      %585 = vmatpush1.bf16.xpose.msra.mxu0 0
      %586 = vmatprep.subr.bf16.mxu0 0
      %587 = vmatpush1.bf16.xpose.msra.mxu0 0
      %588 = vmatprep.subr.bf16.mxu0 0
      %589 = vmatpush1.bf16.xpose.msra.mxu0 0
      %590 = vmatprep.subr.bf16.mxu0 0
      %591 = vmatpush1.bf16.xpose.msra.mxu0 0
      %592 = vmatprep.subr.bf16.mxu0 0
      %593 = vmatpush1.bf16.xpose.msra.mxu0 0
      %594 = vmatprep.subr.bf16.mxu0 0
      %595 = vmatpush1.bf16.xpose.msra.mxu0 0
      %596 = vmatprep.mubr.bf16.mxu0 0
      %597 = vmatmul.mubr.bf16.gmra.mrb[0].mxu0 %v559
      %v598 = vpop.f32.mrb[0].mxu0
      %v599 = vadd.f32 0.0, %v598
      %v600 = vpop.f32.mrb[0].mxu0
      %v601 = vpop.f32.mrb[0].mxu0
      %v602 = vpop.f32.mrb[0].mxu0
      %603 = vdwg.mxu0
      %s604 = scalar_lea.vmem [#allocation2], 16
      %v605 = vld [vmem:[%s604] sm:$0xff]
      %v606 = vsel %vm283, %v599, -inf
      %607 = vmax.xlane.f32.xlu0 %v606
      %v608 = vpop.xlane.xlu0 %607
      %v609 = vmax.f32 %v605, %v608
      %v610 = vsub.f32 %v605, %v609
      %v611 = vmul.f32 %v610, 1.442695
      %v612 = vpow.pop %v611
      %614 = vset.pattern.permute.xlu0 0
      %615 = vperm.xlu0 %614, %v609
      %v616 = vpop.permute.xlu0 %615
      %v618 = vsub.f32 %v599, %v616
      %v619 = vmul.f32 %v618, 1.442695
      %v620 = vpow.pop %v619
      %s621 = scalar_lea.vmem [#allocation3], 16
      %v622 = vld [vmem:[%s621] sm:$0xff]
      %v623 = vmul.f32 %v612, %v622
      %v624 = vsel %vm283, %v620, 0.0
      %625 = vadd.xlane.f32.xlu0 %v624
      %v626 = vpop.xlane.xlu0 %625
      %v627 = vadd.f32 %v623, %v626
      %628 = vst.msk [vmem:[%s621] sm:$0xff] %vm352, %v627
      %v629 = vpack.c.bf16 %v620, %v620
      %630 = vrot.lane.b32.xlu0 %v282, 112
      %v631 = vpop.permute.xlu0 %630
      %v633 = vsel %vm283, %v629, 0
      %v636 = vsel %vm358, %v631, 0
      %638 = vmatprep.subr.bf16.mxu0 0
      %639 = vmatpush1.bf16.msra.mxu0 %v636
      %640 = vmatprep.subr.bf16.mxu0 0
      %641 = vmatpush1.bf16.msra.mxu0 0
      %642 = vmatprep.subr.bf16.mxu0 0
      %643 = vmatpush1.bf16.msra.mxu0 0
      %644 = vmatprep.subr.bf16.mxu0 0
      %645 = vmatpush1.bf16.msra.mxu0 0
      %646 = vmatprep.subr.bf16.mxu0 0
      %647 = vmatpush1.bf16.msra.mxu0 0
      %648 = vmatprep.subr.bf16.mxu0 0
      %649 = vmatpush1.bf16.msra.mxu0 0
      %650 = vmatprep.subr.bf16.mxu0 0
      %651 = vmatpush1.bf16.msra.mxu0 0
      %652 = vmatprep.subr.bf16.mxu0 0
      %653 = vmatpush1.bf16.msra.mxu0 0
      %654 = vmatprep.subr.bf16.mxu0 0
      %655 = vmatpush1.bf16.msra.mxu0 0
      %656 = vmatprep.subr.bf16.mxu0 0
      %657 = vmatpush1.bf16.msra.mxu0 0
      %658 = vmatprep.subr.bf16.mxu0 0
      %659 = vmatpush1.bf16.msra.mxu0 0
      %660 = vmatprep.subr.bf16.mxu0 0
      %661 = vmatpush1.bf16.msra.mxu0 0
      %662 = vmatprep.subr.bf16.mxu0 0
      %663 = vmatpush1.bf16.msra.mxu0 0
      %664 = vmatprep.subr.bf16.mxu0 0
      %665 = vmatpush1.bf16.msra.mxu0 0
      %666 = vmatprep.subr.bf16.mxu0 0
      %667 = vmatpush1.bf16.msra.mxu0 0
      %668 = vmatprep.subr.bf16.mxu0 0
      %669 = vmatpush1.bf16.msra.mxu0 0
      %670 = vmatprep.mubr.bf16.mxu0 0
      %671 = vmatmul.mubr.bf16.gmra.mrb[0].mxu0 %v633
      %v672 = vpop.f32.mrb[0].mxu0
      %v673 = vadd.f32 0.0, %v672
      %v674 = vpop.f32.mrb[0].mxu0
      %v675 = vpop.f32.mrb[0].mxu0
      %v676 = vpop.f32.mrb[0].mxu0
      %677 = vdwg.mxu0
      %v678 = vld [vmem:[#allocation4] sm:$0xff]
      %680 = vset.pattern.permute.xlu0 0
      %681 = vperm.xlu0 %680, %v612
      %v682 = vpop.permute.xlu0 %681
      %v684 = vmul.f32 %v682, %v678
      %686 = vrot.lane.b32.xlu0 %v673, 16
      %v687 = vpop.permute.xlu0 %686
      %v689 = vadd.f32 %v684, %v687
      %vm690 = vcmask 195712
      %691 = vst.msk [vmem:[#allocation4] sm:$0xff] %vm690, %v689
      %692 = vst.msk [vmem:[%s604] sm:$0xff] %vm352, %v609
      %693 = vrot.lane.b32.xlu0 %v278, 104
      %v694 = vpop.permute.xlu0 %693
      %695 = vrot.lane.b32.xlu0 %v280, 104
      %v696 = vpop.permute.xlu0 %695
      %v698 = vsel %vm283, %v694, 0
      %v701 = vsel %vm283, %v696, 0
      %703 = vmatprep.subr.bf16.mxu0 0
      %704 = vmatpush1.bf16.xpose.msra.mxu0 %v701
      %705 = vmatprep.subr.bf16.mxu0 0
      %706 = vmatpush1.bf16.xpose.msra.mxu0 0
      %707 = vmatprep.subr.bf16.mxu0 0
      %708 = vmatpush1.bf16.xpose.msra.mxu0 0
      %709 = vmatprep.subr.bf16.mxu0 0
      %710 = vmatpush1.bf16.xpose.msra.mxu0 0
      %711 = vmatprep.subr.bf16.mxu0 0
      %712 = vmatpush1.bf16.xpose.msra.mxu0 0
      %713 = vmatprep.subr.bf16.mxu0 0
      %714 = vmatpush1.bf16.xpose.msra.mxu0 0
      %715 = vmatprep.subr.bf16.mxu0 0
      %716 = vmatpush1.bf16.xpose.msra.mxu0 0
      %717 = vmatprep.subr.bf16.mxu0 0
      %718 = vmatpush1.bf16.xpose.msra.mxu0 0
      %719 = vmatprep.subr.bf16.mxu0 0
      %720 = vmatpush1.bf16.xpose.msra.mxu0 0
      %721 = vmatprep.subr.bf16.mxu0 0
      %722 = vmatpush1.bf16.xpose.msra.mxu0 0
      %723 = vmatprep.subr.bf16.mxu0 0
      %724 = vmatpush1.bf16.xpose.msra.mxu0 0
      %725 = vmatprep.subr.bf16.mxu0 0
      %726 = vmatpush1.bf16.xpose.msra.mxu0 0
      %727 = vmatprep.subr.bf16.mxu0 0
      %728 = vmatpush1.bf16.xpose.msra.mxu0 0
      %729 = vmatprep.subr.bf16.mxu0 0
      %730 = vmatpush1.bf16.xpose.msra.mxu0 0
      %731 = vmatprep.subr.bf16.mxu0 0
      %732 = vmatpush1.bf16.xpose.msra.mxu0 0
      %733 = vmatprep.subr.bf16.mxu0 0
      %734 = vmatpush1.bf16.xpose.msra.mxu0 0
      %735 = vmatprep.mubr.bf16.mxu0 0
      %736 = vmatmul.mubr.bf16.gmra.mrb[0].mxu0 %v698
      %v737 = vpop.f32.mrb[0].mxu0
      %v738 = vadd.f32 0.0, %v737
      %v739 = vpop.f32.mrb[0].mxu0
      %v740 = vpop.f32.mrb[0].mxu0
      %v741 = vpop.f32.mrb[0].mxu0
      %742 = vdwg.mxu0
      %s743 = scalar_lea.vmem [#allocation2], 24
      %v744 = vld [vmem:[%s743] sm:$0xff]
      %v745 = vsel %vm283, %v738, -inf
      %746 = vmax.xlane.f32.xlu0 %v745
      %v747 = vpop.xlane.xlu0 %746
      %v748 = vmax.f32 %v744, %v747
      %v749 = vsub.f32 %v744, %v748
      %v750 = vmul.f32 %v749, 1.442695
      %v751 = vpow.pop %v750
      %753 = vset.pattern.permute.xlu0 0
      %754 = vperm.xlu0 %753, %v748
      %v755 = vpop.permute.xlu0 %754
      %v757 = vsub.f32 %v738, %v755
      %v758 = vmul.f32 %v757, 1.442695
      %v759 = vpow.pop %v758
      %s760 = scalar_lea.vmem [#allocation3], 24
      %v761 = vld [vmem:[%s760] sm:$0xff]
      %v762 = vmul.f32 %v751, %v761
      %v763 = vsel %vm283, %v759, 0.0
      %764 = vadd.xlane.f32.xlu0 %v763
      %v765 = vpop.xlane.xlu0 %764
      %v766 = vadd.f32 %v762, %v765
      %767 = vst.msk [vmem:[%s760] sm:$0xff] %vm352, %v766
      %v768 = vpack.c.bf16 %v759, %v759
      %769 = vrot.lane.b32.xlu0 %v282, 104
      %v770 = vpop.permute.xlu0 %769
      %v772 = vsel %vm283, %v768, 0
      %v775 = vsel %vm358, %v770, 0
      %777 = vmatprep.subr.bf16.mxu0 0
      %778 = vmatpush1.bf16.msra.mxu0 %v775
      %779 = vmatprep.subr.bf16.mxu0 0
      %780 = vmatpush1.bf16.msra.mxu0 0
      %781 = vmatprep.subr.bf16.mxu0 0
      %782 = vmatpush1.bf16.msra.mxu0 0
      %783 = vmatprep.subr.bf16.mxu0 0
      %784 = vmatpush1.bf16.msra.mxu0 0
      %785 = vmatprep.subr.bf16.mxu0 0
      %786 = vmatpush1.bf16.msra.mxu0 0
      %787 = vmatprep.subr.bf16.mxu0 0
      %788 = vmatpush1.bf16.msra.mxu0 0
      %789 = vmatprep.subr.bf16.mxu0 0
      %790 = vmatpush1.bf16.msra.mxu0 0
      %791 = vmatprep.subr.bf16.mxu0 0
      %792 = vmatpush1.bf16.msra.mxu0 0
      %793 = vmatprep.subr.bf16.mxu0 0
      %794 = vmatpush1.bf16.msra.mxu0 0
      %795 = vmatprep.subr.bf16.mxu0 0
      %796 = vmatpush1.bf16.msra.mxu0 0
      %797 = vmatprep.subr.bf16.mxu0 0
      %798 = vmatpush1.bf16.msra.mxu0 0
      %799 = vmatprep.subr.bf16.mxu0 0
      %800 = vmatpush1.bf16.msra.mxu0 0
      %801 = vmatprep.subr.bf16.mxu0 0
      %802 = vmatpush1.bf16.msra.mxu0 0
      %803 = vmatprep.subr.bf16.mxu0 0
      %804 = vmatpush1.bf16.msra.mxu0 0
      %805 = vmatprep.subr.bf16.mxu0 0
      %806 = vmatpush1.bf16.msra.mxu0 0
      %807 = vmatprep.subr.bf16.mxu0 0
      %808 = vmatpush1.bf16.msra.mxu0 0
      %809 = vmatprep.mubr.bf16.mxu0 0
      %810 = vmatmul.mubr.bf16.gmra.mrb[0].mxu0 %v772
      %v811 = vpop.f32.mrb[0].mxu0
      %v812 = vadd.f32 0.0, %v811
      %v813 = vpop.f32.mrb[0].mxu0
      %v814 = vpop.f32.mrb[0].mxu0
      %v815 = vpop.f32.mrb[0].mxu0
      %816 = vdwg.mxu0
      %v817 = vld [vmem:[#allocation4] sm:$0xff]
      %819 = vset.pattern.permute.xlu0 0
      %820 = vperm.xlu0 %819, %v751
      %v821 = vpop.permute.xlu0 %820
      %v823 = vmul.f32 %v821, %v817
      %825 = vrot.lane.b32.xlu0 %v812, 24
      %v826 = vpop.permute.xlu0 %825
      %v828 = vadd.f32 %v823, %v826
      %vm829 = vcmask 261312
      %830 = vst.msk [vmem:[#allocation4] sm:$0xff] %vm829, %v828
      %831 = vst.msk [vmem:[%s743] sm:$0xff] %vm352, %v748
      // Predicated region
      $region37: #{multi_head_attention.8} parent=31 // pred_check
        %p832 = pneg %p261
      $region38: #{multi_head_attention.8} parent=31 // pred_check_branch
        %834 = sbr.rel (%p832) target = $region40
      $region39: #{multi_head_attention.8} parent=31 // pred_region
        %v835 = vld [vmem:[#allocation4] sm:$0xff]
        %v836 = vld [vmem:[#allocation3] sm:$0xff]
        %v837 = vrcp.pop %v836
        %839 = vset.pattern.permute.xlu0 0
        %840 = vperm.xlu0 %839, %v837
        %v841 = vpop.permute.xlu0 %840
        %v843 = vmul.f32 %v835, %v841
        %844 = vst.msk [vmem:[#allocation4] sm:$0xff] %vm283, %v843
        %v845 = vld [vmem:[#allocation4] sm:$0xff]
        %v846 = vld [vmem:[%s481] sm:$0xff]
        %v847 = vrcp.pop %v846
        %849 = vset.pattern.permute.xlu0 0
        %850 = vperm.xlu0 %849, %v847
        %v851 = vpop.permute.xlu0 %850
        %v853 = vmul.f32 %v845, %v851
        %854 = vst.msk [vmem:[#allocation4] sm:$0xff] %vm551, %v853
        %v855 = vld [vmem:[#allocation4] sm:$0xff]
        %v856 = vld [vmem:[%s621] sm:$0xff]
        %v857 = vrcp.pop %v856
        %859 = vset.pattern.permute.xlu0 0
        %860 = vperm.xlu0 %859, %v857
        %v861 = vpop.permute.xlu0 %860
        %v863 = vmul.f32 %v855, %v861
        %864 = vst.msk [vmem:[#allocation4] sm:$0xff] %vm690, %v863
        %v865 = vld [vmem:[#allocation4] sm:$0xff]
        %v866 = vld [vmem:[%s760] sm:$0xff]
        %v867 = vrcp.pop %v866
        %869 = vset.pattern.permute.xlu0 0
        %870 = vperm.xlu0 %869, %v867
        %v871 = vpop.permute.xlu0 %870
        %v873 = vmul.f32 %v865, %v871
        %874 = vst.msk [vmem:[#allocation4] sm:$0xff] %vm829, %v873
        %v875 = vld [vmem:[#allocation4] sm:$0xff]
        %vm876 = vcmask 261120
        %877 = vst.msk [vmem:[%s259] sm:$0xff] %vm876, %v875
      $region40: #{multi_head_attention.8} parent=31 // pred_fallthru
        _
      %p878 = scmp.lt.s32.totalorder %s19, 1
      %s879 = scalar_select %p878, %s19, 1
      %p880 = scmp.lt.s32.totalorder %s20, 0
      %s881 = scalar_select %p880, %s20, 0
      %s882 = sadd.s32 %s881, %s879
      %s883 = smul.addr %s882, 8
      %s884 = scalar_lea.vmem %s3, %s883
      // Predicated region
      $region41: #{multi_head_attention.8} parent=31 // pred_check
        %p885 = pneg %p137
      $region42: #{multi_head_attention.8} parent=31 // pred_check_branch
        %887 = sbr.rel (%p885) target = $region44
      $region43: #{multi_head_attention.8} parent=31 // pred_region
        _
      $region44: #{multi_head_attention.8} parent=31 // pred_fallthru
        _
    $region32: #{multi_head_attention.8} parent=5 // pred_fallthru
      _
    %p888 = scmp.le.s32.totalorder 2, %s9
    // Predicated region
    $region45: #{multi_head_attention.8} parent=5 // pred_check
      %p889 = pneg %p888
    $region46: #{multi_head_attention.8} parent=5 // pred_check_branch
      %891 = sbr.rel (%p889) target = $region48
    $region47: #{multi_head_attention.8} parent=5 // pred_region
      %s892 = ssub.s32 %s9, 2
      // Predicated region
      $region49: #{multi_head_attention.8} parent=47 // pred_check
        %p893 = pneg %p143
      $region50: #{multi_head_attention.8} parent=47 // pred_check_branch
        %895 = sbr.rel (%p893) target = $region52
      $region51: #{multi_head_attention.8} parent=47 // pred_region
        %p896 = scmp.lt.s32.totalorder %s22, 1
        %s897 = scalar_select %p896, %s22, 1
        %p898 = scmp.lt.s32.totalorder %s23, 0
        %s899 = scalar_select %p898, %s23, 0
        %s900 = sadd.s32 %s899, %s897
        %s901 = smul.addr %s900, 8
        %s902 = scalar_lea.vmem %s3, %s901
      $region52: #{multi_head_attention.8} parent=47 // pred_fallthru
        _
    $region48: #{multi_head_attention.8} parent=5 // pred_fallthru
      _
  $region6: #{multi_head_attention.8} parent=0 // loop_footer
    %s13 = sadd.s32 1, %s9
  $region7: #{multi_head_attention.8} parent=0 // loop_footer_branch
    %8 = sbr.rel target = $region3
  $region8: #{multi_head_attention.8} parent=0 // loop_exit
    _

</llo_original>
